<compile_context>
chip_gen: v7x
topology: tpu7x:2x2x1
jax: 0.10.0
libtpu: 0.0.40
codegen_flags: <defaults>
</compile_context>

<pallas_src>
import functools

import jax
import jax.numpy as jnp
from jax.experimental import pallas as pl
from jax.experimental.pallas import tpu as pltpu


def embed_attn_kernel(x_ref, s_ref, out_ref, *, embed_dim):
    """One row-tile per grid step, lane-dense layout (tile_b, num_embed*embed_dim)."""
    x = x_ref[...].astype(jnp.float32)           # (tb, N*E)
    S = s_ref[...]                               # (N*E, N) 0/1 segment indicator

    # AdaptiveAvgPool1d(1): per-embedding mean over its embed_dim lanes,
    # done as one MXU matmul against the constant indicator matrix.
    pooled = jnp.dot(
        x, S,
        preferred_element_type=jnp.float32,
        precision=jax.lax.Precision.HIGHEST,
    ) * jnp.float32(1.0 / embed_dim)             # (tb, N)

    # Numerically stable softmax over the num_embed axis (exact divide).
    m = jnp.max(pooled, axis=1, keepdims=True)
    e = jnp.exp(pooled - m)
    w = e / jnp.sum(e, axis=1, keepdims=True)    # (tb, N), rows sum to 1

    # Broadcast each embedding's weight across its embed_dim lanes:
    # attn = w @ S^T via dot_general (contract on N), avoiding an XLU transpose.
    attn = jax.lax.dot_general(
        w, S,
        dimension_numbers=(((1,), (1,)), ((), ())),
        preferred_element_type=jnp.float32,
        precision=jax.lax.Precision.HIGHEST,
    )                                            # (tb, N*E)

    out_ref[...] = (x * attn).astype(out_ref.dtype)   # full-lane, unmasked stores


def _pick_row_tile(batch, cap=512):
    """Whole batch in one block when small; else a multiple-of-8 divisor <= cap."""
    if batch <= cap:
        return batch
    for t in range(cap, 7, -1):
        if batch % t == 0 and t % 8 == 0:
            return t
    return batch  # fallback: single block


def embed_attn(x):
    """x: (B, N, E). Returns x * softmax_over_N(mean_over_E(x))."""
    B, N, E = x.shape
    NE = N * E
    # Lane-dense slab: last dim N*E (=256 here) instead of E=32.
    x2 = x.reshape(B, NE)

    # Constant 0/1 segment-indicator matrix: S[l, g] = 1 iff lane l belongs to
    # embedding g (i.e. l // E == g).
    seg_of_lane = jnp.arange(NE, dtype=jnp.int32) // E
    S = (seg_of_lane[:, None] == jnp.arange(N, dtype=jnp.int32)[None, :]).astype(
        jnp.float32
    )

    tile_b = _pick_row_tile(B)
    grid = (B // tile_b,)

    out2 = pl.pallas_call(
        functools.partial(embed_attn_kernel, embed_dim=E),
        out_shape=jax.ShapeDtypeStruct((B, NE), x.dtype),
        grid=grid,
        in_specs=[
            pl.BlockSpec((tile_b, NE), lambda i: (i, 0)),  # x row tile
            pl.BlockSpec((NE, N), lambda i: (0, 0)),       # indicator (same every step)
        ],
        out_specs=pl.BlockSpec((tile_b, NE), lambda i: (i, 0)),
        compiler_params=pltpu.CompilerParams(
            # Row tiles are independent -> shardable across TCs when grid > 1.
            dimension_semantics=("parallel",),
            # Double-buffered in+out tiles at the 512-row cap are ~4 MiB:
            # well inside v7x's 64 MiB physical VMEM and v5e's scoped default.
            vmem_limit_bytes=32 * 1024 * 1024,
        ),
    )(x2, S)
    return out2.reshape(B, N, E)


def embed_attn_ref(x):
    # Pure-JAX reference of the PyTorch forward (the Linear branch is dead there too).
    pooled = jnp.mean(x, axis=-1)            # (B, N)
    a = jax.nn.softmax(pooled, axis=1)
    return x * a[:, :, None]


if __name__ == "__main__":
    B, N, E = 2, 8, 32   # batch=2, num embeddings=8, embed_dim=32 (hidden_dim unused: dead branch)
    key = jax.random.PRNGKey(0)
    x = jax.random.normal(key, (B, N, E), dtype=jnp.float32)

    out = jax.block_until_ready(embed_attn(x))
    ref = embed_attn_ref(x)

    assert out.shape == (B, N, E)
    assert jnp.allclose(out, ref, atol=1e-5, rtol=1e-5), "mismatch vs reference"
    print("KERNEL_OK")
</pallas_src>

<mosaic_0001>
module attributes {stable_mosaic.version = 11 : i64} {
  func.func @embed_attn_kernel(%arg0: i32, %arg1: memref<2x256xf32, #tpu.memory_space<vmem>>, %arg2: memref<256x8xf32, #tpu.memory_space<vmem>>, %arg3: memref<2x256xf32, #tpu.memory_space<vmem>>) attributes {dimension_semantics = [#tpu.dimension_semantics<parallel>], iteration_bounds = array<i64: 1>, scalar_prefetch = 0 : i64, scratch_operands = 0 : i64, tpu.core_type = #tpu.core_type<tc>, window_params = [{transform_indices = @transform_0, window_bounds = array<i64: 2, 256>}, {pipeline_mode = #tpu.pipeline_mode<synchronous>, transform_indices = @transform_1, window_bounds = array<i64: 256, 8>}, {transform_indices = @transform_2, window_bounds = array<i64: 2, 256>}]} {
    %c0 = arith.constant 0 : index
    %c0_0 = arith.constant 0 : index
    %0 = vector.load %arg1[%c0, %c0_0] : memref<2x256xf32, #tpu.memory_space<vmem>>, vector<2x256xf32>
    %c0_1 = arith.constant 0 : index
    %c0_2 = arith.constant 0 : index
    %1 = vector.load %arg2[%c0_1, %c0_2] : memref<256x8xf32, #tpu.memory_space<vmem>>, vector<256x8xf32>
    %cst = arith.constant dense<0.000000e+00> : vector<2x8xf32>
    %2 = tpu.matmul %0, %1, %cst {dimension_numbers = #tpu.dot_dimension_numbers<[1], [0], [0], [1], [0, 0, 1, 1], [], []>, precision = #tpu.contract_precision<fp32>} : vector<2x256xf32>, vector<256x8xf32>, vector<2x8xf32> -> vector<2x8xf32>
    %cst_3 = arith.constant 3.125000e-02 : f32
    %3 = vector.broadcast %cst_3 : f32 to vector<2x8xf32>
    %4 = arith.mulf %2, %3 : vector<2x8xf32>
    %cst_4 = arith.constant dense<0xFF800000> : vector<2xf32>
    %5 = vector.multi_reduction <maximumf>, %4, %cst_4 [1] : vector<2x8xf32> to vector<2xf32>
    %6 = vector.shape_cast %5 : vector<2xf32> to vector<2x1xf32>
    %7 = vector.broadcast %6 : vector<2x1xf32> to vector<2x8xf32>
    %8 = arith.subf %4, %7 : vector<2x8xf32>
    %9 = math.exp %8 : vector<2x8xf32>
    %cst_5 = arith.constant dense<0.000000e+00> : vector<2xf32>
    %10 = vector.multi_reduction <add>, %9, %cst_5 [1] : vector<2x8xf32> to vector<2xf32>
    %11 = vector.shape_cast %10 : vector<2xf32> to vector<2x1xf32>
    %12 = vector.broadcast %11 : vector<2x1xf32> to vector<2x8xf32>
    %13 = arith.divf %9, %12 : vector<2x8xf32>
    %cst_6 = arith.constant dense<0.000000e+00> : vector<2x256xf32>
    %14 = tpu.matmul %13, %1, %cst_6 {dimension_numbers = #tpu.dot_dimension_numbers<[1], [1], [0], [0], [0, 0, 1, 0], [], []>, precision = #tpu.contract_precision<fp32>} : vector<2x8xf32>, vector<256x8xf32>, vector<2x256xf32> -> vector<2x256xf32>
    %15 = arith.mulf %0, %14 : vector<2x256xf32>
    %c0_7 = arith.constant 0 : index
    %c0_8 = arith.constant 0 : index
    %16 = vector.load %arg3[%c0_7, %c0_8] : memref<2x256xf32, #tpu.memory_space<vmem>>, vector<2x256xf32>
    tpu.vector_store %arg3[%c0_7, %c0_8], %15 {strides = array<i32>} : memref<2x256xf32, #tpu.memory_space<vmem>>, vector<2x256xf32>,
    return
  }
  func.func @transform_0(%arg0: i32) -> (i32, i32) {
    %c0_i32 = arith.constant 0 : i32
    %c0_i32_0 = arith.constant 0 : i32
    return %arg0, %c0_i32 : i32, i32
  }
  func.func @transform_1(%arg0: i32) -> (i32, i32) {
    %c0_i32 = arith.constant 0 : i32
    %c0_i32_0 = arith.constant 0 : i32
    %c0_i32_1 = arith.constant 0 : i32
    return %c0_i32, %c0_i32_0 : i32, i32
  }
  func.func @transform_2(%arg0: i32) -> (i32, i32) {
    %c0_i32 = arith.constant 0 : i32
    %c0_i32_0 = arith.constant 0 : i32
    return %arg0, %c0_i32 : i32, i32
  }
}

</mosaic_0001>

<llo_original>
// kernel: tpu_custom_call.1
$region0: #{tpu_custom_call.1}
  #allocation0 [shape = 'u32[]', space=smem, size = 0x4, offset = 0x4, fixed_abs, tag = 'smem constant byte address 0x4 - core index']
  #allocation1 [shape = 'u32[144,128]{1,0:T(1,128)}', space=vmem, size = 0x12000, scoped, tag = 'internal scratch']
  %s0 = inlined_call_operand.vmem [shape: f32[2,256], index: 0, kind: input, shape index: {}]
  %s1 = inlined_call_operand.vmem [shape: f32[256,8], index: 1, kind: input, shape index: {}]
  %s2 = inlined_call_operand.hbm [shape: f32[2,256], index: 2, kind: output, shape index: {}]
  %s3 = sld [smem:[#allocation0]]
  $region18: #{tpu_custom_call.1} parent=0
    _
  %s5 = ssub.s32 1, %s3
  %s6 = scalar_select 0, %s5, %s3
  $region1: #{tpu_custom_call.1} parent=0
    #allocation2 [shape = 'u8[2048]{0}', space=vmem, size = 0x800, scoped, tag = 'output window, operand 0, single buffered']
    #allocation3 [shape = 's32[1]{0}', space=sflag, size = 0x4, scoped, tag = 'scoped memory for tpu_custom_call.1']
    %7 = vsyncpa [#allocation3], 0
    // Predicated region
    $region2: #{tpu_custom_call.1} parent=1 // pred_check
      _
    $region3: #{tpu_custom_call.1} parent=1 // pred_check_branch
      %9 = sbr.rel (0) target = $region5
    $region4: #{tpu_custom_call.1} parent=1 // pred_region
      _
    $region5: #{tpu_custom_call.1} parent=1 // pred_fallthru
      _
    // Predicated region
    $region6: #{tpu_custom_call.1} parent=1 // pred_check
      _
    $region7: #{tpu_custom_call.1} parent=1 // pred_check_branch
      %11 = sbr.rel (0) target = $region9
    $region8: #{tpu_custom_call.1} parent=1 // pred_region
      _
    $region9: #{tpu_custom_call.1} parent=1 // pred_fallthru
      _
    %v12 = vld [vmem:[%s0] sm:$0xf]
    %v13 = vld [vmem:[%s1] sm:$0xff]
    %v14 = vld [vmem:[%s1 + $0x8] sm:$0xff]
    %v15 = vld [vmem:[%s1 + $0x10] sm:$0xff]
    %v16 = vld [vmem:[%s1 + $0x18] sm:$0xff]
    %v17 = vld [vmem:[%s1 + $0x20] sm:$0xff]
    %v18 = vld [vmem:[%s1 + $0x28] sm:$0xff]
    %v19 = vld [vmem:[%s1 + $0x30] sm:$0xff]
    %v20 = vld [vmem:[%s1 + $0x38] sm:$0xff]
    %v21 = vld [vmem:[%s1 + $0x40] sm:$0xff]
    %v22 = vld [vmem:[%s1 + $0x48] sm:$0xff]
    %v23 = vld [vmem:[%s1 + $0x50] sm:$0xff]
    %v24 = vld [vmem:[%s1 + $0x58] sm:$0xff]
    %v25 = vld [vmem:[%s1 + $0x60] sm:$0xff]
    %v26 = vld [vmem:[%s1 + $0x68] sm:$0xff]
    %v27 = vld [vmem:[%s1 + $0x70] sm:$0xff]
    %v28 = vld [vmem:[%s1 + $0x78] sm:$0xff]
    %v29 = vld [vmem:[%s1 + $0x80] sm:$0xff]
    %v30 = vld [vmem:[%s1 + $0x88] sm:$0xff]
    %v31 = vld [vmem:[%s1 + $0x90] sm:$0xff]
    %v32 = vld [vmem:[%s1 + $0x98] sm:$0xff]
    %v33 = vld [vmem:[%s1 + $0xa0] sm:$0xff]
    %v34 = vld [vmem:[%s1 + $0xa8] sm:$0xff]
    %v35 = vld [vmem:[%s1 + $0xb0] sm:$0xff]
    %v36 = vld [vmem:[%s1 + $0xb8] sm:$0xff]
    %v37 = vld [vmem:[%s1 + $0xc0] sm:$0xff]
    %v38 = vld [vmem:[%s1 + $0xc8] sm:$0xff]
    %v39 = vld [vmem:[%s1 + $0xd0] sm:$0xff]
    %v40 = vld [vmem:[%s1 + $0xd8] sm:$0xff]
    %v41 = vld [vmem:[%s1 + $0xe0] sm:$0xff]
    %v42 = vld [vmem:[%s1 + $0xe8] sm:$0xff]
    %v43 = vld [vmem:[%s1 + $0xf0] sm:$0xff]
    %v44 = vld [vmem:[%s1 + $0xf8] sm:$0xff]
    %v47 = vunpack.c.l.s4 1983009808
    %v48 = vunpack.c.0.s8 %v47
    %v49 = vlaneseq
    %v50 = vshrl.u32 %v49, 7
    %v51 = vsub.s32 %v48, %v50
    %v52 = vrot.slane %v12, %v51
    %v53 = vcombine.high %v52, %v52
    %56 = vmatprep.subr.mxu0 0.0
    %v57 = vand.u32 %v13, 4294901760
    %58 = vmatpush1.msra.mxu0 %v57
    %59 = vmatprep.subr.mxu0 0.0
    %v60 = vand.u32 %v14, 4294901760
    %61 = vmatpush1.msra.mxu0 %v60
    %62 = vmatprep.subr.mxu0 0.0
    %v63 = vand.u32 %v15, 4294901760
    %64 = vmatpush1.msra.mxu0 %v63
    %65 = vmatprep.subr.mxu0 0.0
    %v66 = vand.u32 %v16, 4294901760
    %67 = vmatpush1.msra.mxu0 %v66
    %68 = vmatprep.subr.mxu0 0.0
    %v69 = vand.u32 %v17, 4294901760
    %70 = vmatpush1.msra.mxu0 %v69
    %71 = vmatprep.subr.mxu0 0.0
    %v72 = vand.u32 %v18, 4294901760
    %73 = vmatpush1.msra.mxu0 %v72
    %74 = vmatprep.subr.mxu0 0.0
    %v75 = vand.u32 %v19, 4294901760
    %76 = vmatpush1.msra.mxu0 %v75
    %77 = vmatprep.subr.mxu0 0.0
    %v78 = vand.u32 %v20, 4294901760
    %79 = vmatpush1.msra.mxu0 %v78
    %80 = vmatprep.subr.mxu0 0.0
    %v81 = vand.u32 %v21, 4294901760
    %82 = vmatpush1.msra.mxu0 %v81
    %83 = vmatprep.subr.mxu0 0.0
    %v84 = vand.u32 %v22, 4294901760
    %85 = vmatpush1.msra.mxu0 %v84
    %86 = vmatprep.subr.mxu0 0.0
    %v87 = vand.u32 %v23, 4294901760
    %88 = vmatpush1.msra.mxu0 %v87
    %89 = vmatprep.subr.mxu0 0.0
    %v90 = vand.u32 %v24, 4294901760
    %91 = vmatpush1.msra.mxu0 %v90
    %92 = vmatprep.subr.mxu0 0.0
    %v93 = vand.u32 %v25, 4294901760
    %94 = vmatpush1.msra.mxu0 %v93
    %95 = vmatprep.subr.mxu0 0.0
    %v96 = vand.u32 %v26, 4294901760
    %97 = vmatpush1.msra.mxu0 %v96
    %98 = vmatprep.subr.mxu0 0.0
    %v99 = vand.u32 %v27, 4294901760
    %100 = vmatpush1.msra.mxu0 %v99
    %101 = vmatprep.subr.mxu0 0.0
    %v102 = vand.u32 %v28, 4294901760
    %103 = vmatpush1.msra.mxu0 %v102
    %104 = vmatprep.subr.mxu0 0.0
    %v105 = vand.u32 %v29, 4294901760
    %106 = vmatpush1.msra.mxu0 %v105
    %107 = vmatprep.subr.mxu0 0.0
    %v108 = vand.u32 %v30, 4294901760
    %109 = vmatpush1.msra.mxu0 %v108
    %110 = vmatprep.subr.mxu0 0.0
    %v111 = vand.u32 %v31, 4294901760
    %112 = vmatpush1.msra.mxu0 %v111
    %113 = vmatprep.subr.mxu0 0.0
    %v114 = vand.u32 %v32, 4294901760
    %115 = vmatpush1.msra.mxu0 %v114
    %116 = vmatprep.subr.mxu0 0.0
    %v117 = vand.u32 %v33, 4294901760
    %118 = vmatpush1.msra.mxu0 %v117
    %119 = vmatprep.subr.mxu0 0.0
    %v120 = vand.u32 %v34, 4294901760
    %121 = vmatpush1.msra.mxu0 %v120
    %122 = vmatprep.subr.mxu0 0.0
    %v123 = vand.u32 %v35, 4294901760
    %124 = vmatpush1.msra.mxu0 %v123
    %125 = vmatprep.subr.mxu0 0.0
    %v126 = vand.u32 %v36, 4294901760
    %127 = vmatpush1.msra.mxu0 %v126
    %128 = vmatprep.subr.mxu0 0.0
    %v129 = vand.u32 %v37, 4294901760
    %130 = vmatpush1.msra.mxu0 %v129
    %131 = vmatprep.subr.mxu0 0.0
    %v132 = vand.u32 %v38, 4294901760
    %133 = vmatpush1.msra.mxu0 %v132
    %134 = vmatprep.subr.mxu0 0.0
    %v135 = vand.u32 %v39, 4294901760
    %136 = vmatpush1.msra.mxu0 %v135
    %137 = vmatprep.subr.mxu0 0.0
    %v138 = vand.u32 %v40, 4294901760
    %139 = vmatpush1.msra.mxu0 %v138
    %140 = vmatprep.subr.mxu0 0.0
    %v141 = vand.u32 %v41, 4294901760
    %142 = vmatpush1.msra.mxu0 %v141
    %143 = vmatprep.subr.mxu0 0.0
    %v144 = vand.u32 %v42, 4294901760
    %145 = vmatpush1.msra.mxu0 %v144
    %146 = vmatprep.subr.mxu0 0.0
    %v147 = vand.u32 %v43, 4294901760
    %148 = vmatpush1.msra.mxu0 %v147
    %149 = vmatprep.subr.mxu0 0.0
    %v150 = vand.u32 %v44, 4294901760
    %151 = vmatpush1.msra.mxu0 %v150
    %v152 = vand.u32 %v53, 4294901760
    %v153 = vsub.f32 %v53, %v152
    %v154 = vand.u32 %v153, 4294901760
    %v155 = vsub.f32 %v153, %v154
    %v156 = vand.u32 %v155, 4294901760
    %157 = vmatprep.mubr.f32.mxu0 %v156
    %v158 = vand.u32 %v52, 4294901760
    %v159 = vsub.f32 %v52, %v158
    %v160 = vand.u32 %v159, 4294901760
    %v161 = vsub.f32 %v159, %v160
    %v162 = vand.u32 %v161, 4294901760
    %163 = vmatmul.mubr.f32.gmra.mrb[0].mxu0 %v162
    %v164 = vpop.f32.mrb[0].mxu0
    %v165 = vadd.f32 0.0, %v164
    %v166 = vpop.f32.mrb[0].mxu0
    %167 = vdwg.mxu0
    %168 = vmatprep.subr.mxu0 0.0
    %v169 = vand.u32 %v13, 4294901760
    %v170 = vsub.f32 %v13, %v169
    %v171 = vand.u32 %v170, 4294901760
    %v172 = vsub.f32 %v170, %v171
    %v173 = vand.u32 %v172, 4294901760
    %174 = vmatpush1.msra.mxu0 %v173
    %175 = vmatprep.subr.mxu0 0.0
    %v176 = vand.u32 %v14, 4294901760
    %v177 = vsub.f32 %v14, %v176
    %v178 = vand.u32 %v177, 4294901760
    %v179 = vsub.f32 %v177, %v178
    %v180 = vand.u32 %v179, 4294901760
    %181 = vmatpush1.msra.mxu0 %v180
    %182 = vmatprep.subr.mxu0 0.0
    %v183 = vand.u32 %v15, 4294901760
    %v184 = vsub.f32 %v15, %v183
    %v185 = vand.u32 %v184, 4294901760
    %v186 = vsub.f32 %v184, %v185
    %v187 = vand.u32 %v186, 4294901760
    %188 = vmatpush1.msra.mxu0 %v187
    %189 = vmatprep.subr.mxu0 0.0
    %v190 = vand.u32 %v16, 4294901760
    %v191 = vsub.f32 %v16, %v190
    %v192 = vand.u32 %v191, 4294901760
    %v193 = vsub.f32 %v191, %v192
    %v194 = vand.u32 %v193, 4294901760
    %195 = vmatpush1.msra.mxu0 %v194
    %196 = vmatprep.subr.mxu0 0.0
    %v197 = vand.u32 %v17, 4294901760
    %v198 = vsub.f32 %v17, %v197
    %v199 = vand.u32 %v198, 4294901760
    %v200 = vsub.f32 %v198, %v199
    %v201 = vand.u32 %v200, 4294901760
    %202 = vmatpush1.msra.mxu0 %v201
    %203 = vmatprep.subr.mxu0 0.0
    %v204 = vand.u32 %v18, 4294901760
    %v205 = vsub.f32 %v18, %v204
    %v206 = vand.u32 %v205, 4294901760
    %v207 = vsub.f32 %v205, %v206
    %v208 = vand.u32 %v207, 4294901760
    %209 = vmatpush1.msra.mxu0 %v208
    %210 = vmatprep.subr.mxu0 0.0
    %v211 = vand.u32 %v19, 4294901760
    %v212 = vsub.f32 %v19, %v211
    %v213 = vand.u32 %v212, 4294901760
    %v214 = vsub.f32 %v212, %v213
    %v215 = vand.u32 %v214, 4294901760
    %216 = vmatpush1.msra.mxu0 %v215
    %217 = vmatprep.subr.mxu0 0.0
    %v218 = vand.u32 %v20, 4294901760
    %v219 = vsub.f32 %v20, %v218
    %v220 = vand.u32 %v219, 4294901760
    %v221 = vsub.f32 %v219, %v220
    %v222 = vand.u32 %v221, 4294901760
    %223 = vmatpush1.msra.mxu0 %v222
    %224 = vmatprep.subr.mxu0 0.0
    %v225 = vand.u32 %v21, 4294901760
    %v226 = vsub.f32 %v21, %v225
    %v227 = vand.u32 %v226, 4294901760
    %v228 = vsub.f32 %v226, %v227
    %v229 = vand.u32 %v228, 4294901760
    %230 = vmatpush1.msra.mxu0 %v229
    %231 = vmatprep.subr.mxu0 0.0
    %v232 = vand.u32 %v22, 4294901760
    %v233 = vsub.f32 %v22, %v232
    %v234 = vand.u32 %v233, 4294901760
    %v235 = vsub.f32 %v233, %v234
    %v236 = vand.u32 %v235, 4294901760
    %237 = vmatpush1.msra.mxu0 %v236
    %238 = vmatprep.subr.mxu0 0.0
    %v239 = vand.u32 %v23, 4294901760
    %v240 = vsub.f32 %v23, %v239
    %v241 = vand.u32 %v240, 4294901760
    %v242 = vsub.f32 %v240, %v241
    %v243 = vand.u32 %v242, 4294901760
    %244 = vmatpush1.msra.mxu0 %v243
    %245 = vmatprep.subr.mxu0 0.0
    %v246 = vand.u32 %v24, 4294901760
    %v247 = vsub.f32 %v24, %v246
    %v248 = vand.u32 %v247, 4294901760
    %v249 = vsub.f32 %v247, %v248
    %v250 = vand.u32 %v249, 4294901760
    %251 = vmatpush1.msra.mxu0 %v250
    %252 = vmatprep.subr.mxu0 0.0
    %v253 = vand.u32 %v25, 4294901760
    %v254 = vsub.f32 %v25, %v253
    %v255 = vand.u32 %v254, 4294901760
    %v256 = vsub.f32 %v254, %v255
    %v257 = vand.u32 %v256, 4294901760
    %258 = vmatpush1.msra.mxu0 %v257
    %259 = vmatprep.subr.mxu0 0.0
    %v260 = vand.u32 %v26, 4294901760
    %v261 = vsub.f32 %v26, %v260
    %v262 = vand.u32 %v261, 4294901760
    %v263 = vsub.f32 %v261, %v262
    %v264 = vand.u32 %v263, 4294901760
    %265 = vmatpush1.msra.mxu0 %v264
    %266 = vmatprep.subr.mxu0 0.0
    %v267 = vand.u32 %v27, 4294901760
    %v268 = vsub.f32 %v27, %v267
    %v269 = vand.u32 %v268, 4294901760
    %v270 = vsub.f32 %v268, %v269
    %v271 = vand.u32 %v270, 4294901760
    %272 = vmatpush1.msra.mxu0 %v271
    %273 = vmatprep.subr.mxu0 0.0
    %v274 = vand.u32 %v28, 4294901760
    %v275 = vsub.f32 %v28, %v274
    %v276 = vand.u32 %v275, 4294901760
    %v277 = vsub.f32 %v275, %v276
    %v278 = vand.u32 %v277, 4294901760
    %279 = vmatpush1.msra.mxu0 %v278
    %280 = vmatprep.subr.mxu0 0.0
    %v281 = vand.u32 %v29, 4294901760
    %v282 = vsub.f32 %v29, %v281
    %v283 = vand.u32 %v282, 4294901760
    %v284 = vsub.f32 %v282, %v283
    %v285 = vand.u32 %v284, 4294901760
    %286 = vmatpush1.msra.mxu0 %v285
    %287 = vmatprep.subr.mxu0 0.0
    %v288 = vand.u32 %v30, 4294901760
    %v289 = vsub.f32 %v30, %v288
    %v290 = vand.u32 %v289, 4294901760
    %v291 = vsub.f32 %v289, %v290
    %v292 = vand.u32 %v291, 4294901760
    %293 = vmatpush1.msra.mxu0 %v292
    %294 = vmatprep.subr.mxu0 0.0
    %v295 = vand.u32 %v31, 4294901760
    %v296 = vsub.f32 %v31, %v295
    %v297 = vand.u32 %v296, 4294901760
    %v298 = vsub.f32 %v296, %v297
    %v299 = vand.u32 %v298, 4294901760
    %300 = vmatpush1.msra.mxu0 %v299
    %301 = vmatprep.subr.mxu0 0.0
    %v302 = vand.u32 %v32, 4294901760
    %v303 = vsub.f32 %v32, %v302
    %v304 = vand.u32 %v303, 4294901760
    %v305 = vsub.f32 %v303, %v304
    %v306 = vand.u32 %v305, 4294901760
    %307 = vmatpush1.msra.mxu0 %v306
    %308 = vmatprep.subr.mxu0 0.0
    %v309 = vand.u32 %v33, 4294901760
    %v310 = vsub.f32 %v33, %v309
    %v311 = vand.u32 %v310, 4294901760
    %v312 = vsub.f32 %v310, %v311
    %v313 = vand.u32 %v312, 4294901760
    %314 = vmatpush1.msra.mxu0 %v313
    %315 = vmatprep.subr.mxu0 0.0
    %v316 = vand.u32 %v34, 4294901760
    %v317 = vsub.f32 %v34, %v316
    %v318 = vand.u32 %v317, 4294901760
    %v319 = vsub.f32 %v317, %v318
    %v320 = vand.u32 %v319, 4294901760
    %321 = vmatpush1.msra.mxu0 %v320
    %322 = vmatprep.subr.mxu0 0.0
    %v323 = vand.u32 %v35, 4294901760
    %v324 = vsub.f32 %v35, %v323
    %v325 = vand.u32 %v324, 4294901760
    %v326 = vsub.f32 %v324, %v325
    %v327 = vand.u32 %v326, 4294901760
    %328 = vmatpush1.msra.mxu0 %v327
    %329 = vmatprep.subr.mxu0 0.0
    %v330 = vand.u32 %v36, 4294901760
    %v331 = vsub.f32 %v36, %v330
    %v332 = vand.u32 %v331, 4294901760
    %v333 = vsub.f32 %v331, %v332
    %v334 = vand.u32 %v333, 4294901760
    %335 = vmatpush1.msra.mxu0 %v334
    %336 = vmatprep.subr.mxu0 0.0
    %v337 = vand.u32 %v37, 4294901760
    %v338 = vsub.f32 %v37, %v337
    %v339 = vand.u32 %v338, 4294901760
    %v340 = vsub.f32 %v338, %v339
    %v341 = vand.u32 %v340, 4294901760
    %342 = vmatpush1.msra.mxu0 %v341
    %343 = vmatprep.subr.mxu0 0.0
    %v344 = vand.u32 %v38, 4294901760
    %v345 = vsub.f32 %v38, %v344
    %v346 = vand.u32 %v345, 4294901760
    %v347 = vsub.f32 %v345, %v346
    %v348 = vand.u32 %v347, 4294901760
    %349 = vmatpush1.msra.mxu0 %v348
    %350 = vmatprep.subr.mxu0 0.0
    %v351 = vand.u32 %v39, 4294901760
    %v352 = vsub.f32 %v39, %v351
    %v353 = vand.u32 %v352, 4294901760
    %v354 = vsub.f32 %v352, %v353
    %v355 = vand.u32 %v354, 4294901760
    %356 = vmatpush1.msra.mxu0 %v355
    %357 = vmatprep.subr.mxu0 0.0
    %v358 = vand.u32 %v40, 4294901760
    %v359 = vsub.f32 %v40, %v358
    %v360 = vand.u32 %v359, 4294901760
    %v361 = vsub.f32 %v359, %v360
    %v362 = vand.u32 %v361, 4294901760
    %363 = vmatpush1.msra.mxu0 %v362
    %364 = vmatprep.subr.mxu0 0.0
    %v365 = vand.u32 %v41, 4294901760
    %v366 = vsub.f32 %v41, %v365
    %v367 = vand.u32 %v366, 4294901760
    %v368 = vsub.f32 %v366, %v367
    %v369 = vand.u32 %v368, 4294901760
    %370 = vmatpush1.msra.mxu0 %v369
    %371 = vmatprep.subr.mxu0 0.0
    %v372 = vand.u32 %v42, 4294901760
    %v373 = vsub.f32 %v42, %v372
    %v374 = vand.u32 %v373, 4294901760
    %v375 = vsub.f32 %v373, %v374
    %v376 = vand.u32 %v375, 4294901760
    %377 = vmatpush1.msra.mxu0 %v376
    %378 = vmatprep.subr.mxu0 0.0
    %v379 = vand.u32 %v43, 4294901760
    %v380 = vsub.f32 %v43, %v379
    %v381 = vand.u32 %v380, 4294901760
    %v382 = vsub.f32 %v380, %v381
    %v383 = vand.u32 %v382, 4294901760
    %384 = vmatpush1.msra.mxu0 %v383
    %385 = vmatprep.subr.mxu0 0.0
    %v386 = vand.u32 %v44, 4294901760
    %v387 = vsub.f32 %v44, %v386
    %v388 = vand.u32 %v387, 4294901760
    %v389 = vsub.f32 %v387, %v388
    %v390 = vand.u32 %v389, 4294901760
    %391 = vmatpush1.msra.mxu0 %v390
    %v392 = vand.u32 %v53, 4294901760
    %393 = vmatprep.mubr.f32.mxu0 %v392
    %v394 = vand.u32 %v52, 4294901760
    %395 = vmatmul.mubr.f32.gmra.mrb[0].mxu0 %v394
    %v396 = vpop.f32.mrb[0].mxu0
    %v397 = vadd.f32 %v165, %v396
    %v398 = vpop.f32.mrb[0].mxu0
    %399 = vdwg.mxu0
    %400 = vmatprep.subr.mxu0 0.0
    %v401 = vand.u32 %v13, 4294901760
    %v402 = vsub.f32 %v13, %v401
    %403 = vmatpush1.msra.mxu0 %v402
    %404 = vmatprep.subr.mxu0 0.0
    %v405 = vand.u32 %v14, 4294901760
    %v406 = vsub.f32 %v14, %v405
    %407 = vmatpush1.msra.mxu0 %v406
    %408 = vmatprep.subr.mxu0 0.0
    %v409 = vand.u32 %v15, 4294901760
    %v410 = vsub.f32 %v15, %v409
    %411 = vmatpush1.msra.mxu0 %v410
    %412 = vmatprep.subr.mxu0 0.0
    %v413 = vand.u32 %v16, 4294901760
    %v414 = vsub.f32 %v16, %v413
    %415 = vmatpush1.msra.mxu0 %v414
    %416 = vmatprep.subr.mxu0 0.0
    %v417 = vand.u32 %v17, 4294901760
    %v418 = vsub.f32 %v17, %v417
    %419 = vmatpush1.msra.mxu0 %v418
    %420 = vmatprep.subr.mxu0 0.0
    %v421 = vand.u32 %v18, 4294901760
    %v422 = vsub.f32 %v18, %v421
    %423 = vmatpush1.msra.mxu0 %v422
    %424 = vmatprep.subr.mxu0 0.0
    %v425 = vand.u32 %v19, 4294901760
    %v426 = vsub.f32 %v19, %v425
    %427 = vmatpush1.msra.mxu0 %v426
    %428 = vmatprep.subr.mxu0 0.0
    %v429 = vand.u32 %v20, 4294901760
    %v430 = vsub.f32 %v20, %v429
    %431 = vmatpush1.msra.mxu0 %v430
    %432 = vmatprep.subr.mxu0 0.0
    %v433 = vand.u32 %v21, 4294901760
    %v434 = vsub.f32 %v21, %v433
    %435 = vmatpush1.msra.mxu0 %v434
    %436 = vmatprep.subr.mxu0 0.0
    %v437 = vand.u32 %v22, 4294901760
    %v438 = vsub.f32 %v22, %v437
    %439 = vmatpush1.msra.mxu0 %v438
    %440 = vmatprep.subr.mxu0 0.0
    %v441 = vand.u32 %v23, 4294901760
    %v442 = vsub.f32 %v23, %v441
    %443 = vmatpush1.msra.mxu0 %v442
    %444 = vmatprep.subr.mxu0 0.0
    %v445 = vand.u32 %v24, 4294901760
    %v446 = vsub.f32 %v24, %v445
    %447 = vmatpush1.msra.mxu0 %v446
    %448 = vmatprep.subr.mxu0 0.0
    %v449 = vand.u32 %v25, 4294901760
    %v450 = vsub.f32 %v25, %v449
    %451 = vmatpush1.msra.mxu0 %v450
    %452 = vmatprep.subr.mxu0 0.0
    %v453 = vand.u32 %v26, 4294901760
    %v454 = vsub.f32 %v26, %v453
    %455 = vmatpush1.msra.mxu0 %v454
    %456 = vmatprep.subr.mxu0 0.0
    %v457 = vand.u32 %v27, 4294901760
    %v458 = vsub.f32 %v27, %v457
    %459 = vmatpush1.msra.mxu0 %v458
    %460 = vmatprep.subr.mxu0 0.0
    %v461 = vand.u32 %v28, 4294901760
    %v462 = vsub.f32 %v28, %v461
    %463 = vmatpush1.msra.mxu0 %v462
    %464 = vmatprep.subr.mxu0 0.0
    %v465 = vand.u32 %v29, 4294901760
    %v466 = vsub.f32 %v29, %v465
    %467 = vmatpush1.msra.mxu0 %v466
    %468 = vmatprep.subr.mxu0 0.0
    %v469 = vand.u32 %v30, 4294901760
    %v470 = vsub.f32 %v30, %v469
    %471 = vmatpush1.msra.mxu0 %v470
    %472 = vmatprep.subr.mxu0 0.0
    %v473 = vand.u32 %v31, 4294901760
    %v474 = vsub.f32 %v31, %v473
    %475 = vmatpush1.msra.mxu0 %v474
    %476 = vmatprep.subr.mxu0 0.0
    %v477 = vand.u32 %v32, 4294901760
    %v478 = vsub.f32 %v32, %v477
    %479 = vmatpush1.msra.mxu0 %v478
    %480 = vmatprep.subr.mxu0 0.0
    %v481 = vand.u32 %v33, 4294901760
    %v482 = vsub.f32 %v33, %v481
    %483 = vmatpush1.msra.mxu0 %v482
    %484 = vmatprep.subr.mxu0 0.0
    %v485 = vand.u32 %v34, 4294901760
    %v486 = vsub.f32 %v34, %v485
    %487 = vmatpush1.msra.mxu0 %v486
    %488 = vmatprep.subr.mxu0 0.0
    %v489 = vand.u32 %v35, 4294901760
    %v490 = vsub.f32 %v35, %v489
    %491 = vmatpush1.msra.mxu0 %v490
    %492 = vmatprep.subr.mxu0 0.0
    %v493 = vand.u32 %v36, 4294901760
    %v494 = vsub.f32 %v36, %v493
    %495 = vmatpush1.msra.mxu0 %v494
    %496 = vmatprep.subr.mxu0 0.0
    %v497 = vand.u32 %v37, 4294901760
    %v498 = vsub.f32 %v37, %v497
    %499 = vmatpush1.msra.mxu0 %v498
    %500 = vmatprep.subr.mxu0 0.0
    %v501 = vand.u32 %v38, 4294901760
    %v502 = vsub.f32 %v38, %v501
    %503 = vmatpush1.msra.mxu0 %v502
    %504 = vmatprep.subr.mxu0 0.0
    %v505 = vand.u32 %v39, 4294901760
    %v506 = vsub.f32 %v39, %v505
    %507 = vmatpush1.msra.mxu0 %v506
    %508 = vmatprep.subr.mxu0 0.0
    %v509 = vand.u32 %v40, 4294901760
    %v510 = vsub.f32 %v40, %v509
    %511 = vmatpush1.msra.mxu0 %v510
    %512 = vmatprep.subr.mxu0 0.0
    %v513 = vand.u32 %v41, 4294901760
    %v514 = vsub.f32 %v41, %v513
    %515 = vmatpush1.msra.mxu0 %v514
    %516 = vmatprep.subr.mxu0 0.0
    %v517 = vand.u32 %v42, 4294901760
    %v518 = vsub.f32 %v42, %v517
    %519 = vmatpush1.msra.mxu0 %v518
    %520 = vmatprep.subr.mxu0 0.0
    %v521 = vand.u32 %v43, 4294901760
    %v522 = vsub.f32 %v43, %v521
    %523 = vmatpush1.msra.mxu0 %v522
    %524 = vmatprep.subr.mxu0 0.0
    %v525 = vand.u32 %v44, 4294901760
    %v526 = vsub.f32 %v44, %v525
    %527 = vmatpush1.msra.mxu0 %v526
    %v528 = vand.u32 %v53, 4294901760
    %v529 = vsub.f32 %v53, %v528
    %530 = vmatprep.mubr.f32.mxu0 %v529
    %v531 = vand.u32 %v52, 4294901760
    %v532 = vsub.f32 %v52, %v531
    %533 = vmatmul.mubr.f32.gmra.mrb[0].mxu0 %v532
    %v534 = vpop.f32.mrb[0].mxu0
    %v535 = vadd.f32 %v397, %v534
    %v536 = vpop.f32.mrb[0].mxu0
    %537 = vdwg.mxu0
    %538 = vmatprep.subr.mxu0 0.0
    %v539 = vand.u32 %v13, 4294901760
    %540 = vmatpush1.msra.mxu0 %v539
    %541 = vmatprep.subr.mxu0 0.0
    %v542 = vand.u32 %v14, 4294901760
    %543 = vmatpush1.msra.mxu0 %v542
    %544 = vmatprep.subr.mxu0 0.0
    %v545 = vand.u32 %v15, 4294901760
    %546 = vmatpush1.msra.mxu0 %v545
    %547 = vmatprep.subr.mxu0 0.0
    %v548 = vand.u32 %v16, 4294901760
    %549 = vmatpush1.msra.mxu0 %v548
    %550 = vmatprep.subr.mxu0 0.0
    %v551 = vand.u32 %v17, 4294901760
    %552 = vmatpush1.msra.mxu0 %v551
    %553 = vmatprep.subr.mxu0 0.0
    %v554 = vand.u32 %v18, 4294901760
    %555 = vmatpush1.msra.mxu0 %v554
    %556 = vmatprep.subr.mxu0 0.0
    %v557 = vand.u32 %v19, 4294901760
    %558 = vmatpush1.msra.mxu0 %v557
    %559 = vmatprep.subr.mxu0 0.0
    %v560 = vand.u32 %v20, 4294901760
    %561 = vmatpush1.msra.mxu0 %v560
    %562 = vmatprep.subr.mxu0 0.0
    %v563 = vand.u32 %v21, 4294901760
    %564 = vmatpush1.msra.mxu0 %v563
    %565 = vmatprep.subr.mxu0 0.0
    %v566 = vand.u32 %v22, 4294901760
    %567 = vmatpush1.msra.mxu0 %v566
    %568 = vmatprep.subr.mxu0 0.0
    %v569 = vand.u32 %v23, 4294901760
    %570 = vmatpush1.msra.mxu0 %v569
    %571 = vmatprep.subr.mxu0 0.0
    %v572 = vand.u32 %v24, 4294901760
    %573 = vmatpush1.msra.mxu0 %v572
    %574 = vmatprep.subr.mxu0 0.0
    %v575 = vand.u32 %v25, 4294901760
    %576 = vmatpush1.msra.mxu0 %v575
    %577 = vmatprep.subr.mxu0 0.0
    %v578 = vand.u32 %v26, 4294901760
    %579 = vmatpush1.msra.mxu0 %v578
    %580 = vmatprep.subr.mxu0 0.0
    %v581 = vand.u32 %v27, 4294901760
    %582 = vmatpush1.msra.mxu0 %v581
    %583 = vmatprep.subr.mxu0 0.0
    %v584 = vand.u32 %v28, 4294901760
    %585 = vmatpush1.msra.mxu0 %v584
    %586 = vmatprep.subr.mxu0 0.0
    %v587 = vand.u32 %v29, 4294901760
    %588 = vmatpush1.msra.mxu0 %v587
    %589 = vmatprep.subr.mxu0 0.0
    %v590 = vand.u32 %v30, 4294901760
    %591 = vmatpush1.msra.mxu0 %v590
    %592 = vmatprep.subr.mxu0 0.0
    %v593 = vand.u32 %v31, 4294901760
    %594 = vmatpush1.msra.mxu0 %v593
    %595 = vmatprep.subr.mxu0 0.0
    %v596 = vand.u32 %v32, 4294901760
    %597 = vmatpush1.msra.mxu0 %v596
    %598 = vmatprep.subr.mxu0 0.0
    %v599 = vand.u32 %v33, 4294901760
    %600 = vmatpush1.msra.mxu0 %v599
    %601 = vmatprep.subr.mxu0 0.0
    %v602 = vand.u32 %v34, 4294901760
    %603 = vmatpush1.msra.mxu0 %v602
    %604 = vmatprep.subr.mxu0 0.0
    %v605 = vand.u32 %v35, 4294901760
    %606 = vmatpush1.msra.mxu0 %v605
    %607 = vmatprep.subr.mxu0 0.0
    %v608 = vand.u32 %v36, 4294901760
    %609 = vmatpush1.msra.mxu0 %v608
    %610 = vmatprep.subr.mxu0 0.0
    %v611 = vand.u32 %v37, 4294901760
    %612 = vmatpush1.msra.mxu0 %v611
    %613 = vmatprep.subr.mxu0 0.0
    %v614 = vand.u32 %v38, 4294901760
    %615 = vmatpush1.msra.mxu0 %v614
    %616 = vmatprep.subr.mxu0 0.0
    %v617 = vand.u32 %v39, 4294901760
    %618 = vmatpush1.msra.mxu0 %v617
    %619 = vmatprep.subr.mxu0 0.0
    %v620 = vand.u32 %v40, 4294901760
    %621 = vmatpush1.msra.mxu0 %v620
    %622 = vmatprep.subr.mxu0 0.0
    %v623 = vand.u32 %v41, 4294901760
    %624 = vmatpush1.msra.mxu0 %v623
    %625 = vmatprep.subr.mxu0 0.0
    %v626 = vand.u32 %v42, 4294901760
    %627 = vmatpush1.msra.mxu0 %v626
    %628 = vmatprep.subr.mxu0 0.0
    %v629 = vand.u32 %v43, 4294901760
    %630 = vmatpush1.msra.mxu0 %v629
    %631 = vmatprep.subr.mxu0 0.0
    %v632 = vand.u32 %v44, 4294901760
    %633 = vmatpush1.msra.mxu0 %v632
    %v634 = vand.u32 %v53, 4294901760
    %v635 = vsub.f32 %v53, %v634
    %v636 = vand.u32 %v635, 4294901760
    %637 = vmatprep.mubr.f32.mxu0 %v636
    %v638 = vand.u32 %v52, 4294901760
    %v639 = vsub.f32 %v52, %v638
    %v640 = vand.u32 %v639, 4294901760
    %641 = vmatmul.mubr.f32.gmra.mrb[0].mxu0 %v640
    %v642 = vpop.f32.mrb[0].mxu0
    %v643 = vadd.f32 %v535, %v642
    %v644 = vpop.f32.mrb[0].mxu0
    %645 = vdwg.mxu0
    %646 = vmatprep.subr.mxu0 0.0
    %v647 = vand.u32 %v13, 4294901760
    %v648 = vsub.f32 %v13, %v647
    %v649 = vand.u32 %v648, 4294901760
    %650 = vmatpush1.msra.mxu0 %v649
    %651 = vmatprep.subr.mxu0 0.0
    %v652 = vand.u32 %v14, 4294901760
    %v653 = vsub.f32 %v14, %v652
    %v654 = vand.u32 %v653, 4294901760
    %655 = vmatpush1.msra.mxu0 %v654
    %656 = vmatprep.subr.mxu0 0.0
    %v657 = vand.u32 %v15, 4294901760
    %v658 = vsub.f32 %v15, %v657
    %v659 = vand.u32 %v658, 4294901760
    %660 = vmatpush1.msra.mxu0 %v659
    %661 = vmatprep.subr.mxu0 0.0
    %v662 = vand.u32 %v16, 4294901760
    %v663 = vsub.f32 %v16, %v662
    %v664 = vand.u32 %v663, 4294901760
    %665 = vmatpush1.msra.mxu0 %v664
    %666 = vmatprep.subr.mxu0 0.0
    %v667 = vand.u32 %v17, 4294901760
    %v668 = vsub.f32 %v17, %v667
    %v669 = vand.u32 %v668, 4294901760
    %670 = vmatpush1.msra.mxu0 %v669
    %671 = vmatprep.subr.mxu0 0.0
    %v672 = vand.u32 %v18, 4294901760
    %v673 = vsub.f32 %v18, %v672
    %v674 = vand.u32 %v673, 4294901760
    %675 = vmatpush1.msra.mxu0 %v674
    %676 = vmatprep.subr.mxu0 0.0
    %v677 = vand.u32 %v19, 4294901760
    %v678 = vsub.f32 %v19, %v677
    %v679 = vand.u32 %v678, 4294901760
    %680 = vmatpush1.msra.mxu0 %v679
    %681 = vmatprep.subr.mxu0 0.0
    %v682 = vand.u32 %v20, 4294901760
    %v683 = vsub.f32 %v20, %v682
    %v684 = vand.u32 %v683, 4294901760
    %685 = vmatpush1.msra.mxu0 %v684
    %686 = vmatprep.subr.mxu0 0.0
    %v687 = vand.u32 %v21, 4294901760
    %v688 = vsub.f32 %v21, %v687
    %v689 = vand.u32 %v688, 4294901760
    %690 = vmatpush1.msra.mxu0 %v689
    %691 = vmatprep.subr.mxu0 0.0
    %v692 = vand.u32 %v22, 4294901760
    %v693 = vsub.f32 %v22, %v692
    %v694 = vand.u32 %v693, 4294901760
    %695 = vmatpush1.msra.mxu0 %v694
    %696 = vmatprep.subr.mxu0 0.0
    %v697 = vand.u32 %v23, 4294901760
    %v698 = vsub.f32 %v23, %v697
    %v699 = vand.u32 %v698, 4294901760
    %700 = vmatpush1.msra.mxu0 %v699
    %701 = vmatprep.subr.mxu0 0.0
    %v702 = vand.u32 %v24, 4294901760
    %v703 = vsub.f32 %v24, %v702
    %v704 = vand.u32 %v703, 4294901760
    %705 = vmatpush1.msra.mxu0 %v704
    %706 = vmatprep.subr.mxu0 0.0
    %v707 = vand.u32 %v25, 4294901760
    %v708 = vsub.f32 %v25, %v707
    %v709 = vand.u32 %v708, 4294901760
    %710 = vmatpush1.msra.mxu0 %v709
    %711 = vmatprep.subr.mxu0 0.0
    %v712 = vand.u32 %v26, 4294901760
    %v713 = vsub.f32 %v26, %v712
    %v714 = vand.u32 %v713, 4294901760
    %715 = vmatpush1.msra.mxu0 %v714
    %716 = vmatprep.subr.mxu0 0.0
    %v717 = vand.u32 %v27, 4294901760
    %v718 = vsub.f32 %v27, %v717
    %v719 = vand.u32 %v718, 4294901760
    %720 = vmatpush1.msra.mxu0 %v719
    %721 = vmatprep.subr.mxu0 0.0
    %v722 = vand.u32 %v28, 4294901760
    %v723 = vsub.f32 %v28, %v722
    %v724 = vand.u32 %v723, 4294901760
    %725 = vmatpush1.msra.mxu0 %v724
    %726 = vmatprep.subr.mxu0 0.0
    %v727 = vand.u32 %v29, 4294901760
    %v728 = vsub.f32 %v29, %v727
    %v729 = vand.u32 %v728, 4294901760
    %730 = vmatpush1.msra.mxu0 %v729
    %731 = vmatprep.subr.mxu0 0.0
    %v732 = vand.u32 %v30, 4294901760
    %v733 = vsub.f32 %v30, %v732
    %v734 = vand.u32 %v733, 4294901760
    %735 = vmatpush1.msra.mxu0 %v734
    %736 = vmatprep.subr.mxu0 0.0
    %v737 = vand.u32 %v31, 4294901760
    %v738 = vsub.f32 %v31, %v737
    %v739 = vand.u32 %v738, 4294901760
    %740 = vmatpush1.msra.mxu0 %v739
    %741 = vmatprep.subr.mxu0 0.0
    %v742 = vand.u32 %v32, 4294901760
    %v743 = vsub.f32 %v32, %v742
    %v744 = vand.u32 %v743, 4294901760
    %745 = vmatpush1.msra.mxu0 %v744
    %746 = vmatprep.subr.mxu0 0.0
    %v747 = vand.u32 %v33, 4294901760
    %v748 = vsub.f32 %v33, %v747
    %v749 = vand.u32 %v748, 4294901760
    %750 = vmatpush1.msra.mxu0 %v749
    %751 = vmatprep.subr.mxu0 0.0
    %v752 = vand.u32 %v34, 4294901760
    %v753 = vsub.f32 %v34, %v752
    %v754 = vand.u32 %v753, 4294901760
    %755 = vmatpush1.msra.mxu0 %v754
    %756 = vmatprep.subr.mxu0 0.0
    %v757 = vand.u32 %v35, 4294901760
    %v758 = vsub.f32 %v35, %v757
    %v759 = vand.u32 %v758, 4294901760
    %760 = vmatpush1.msra.mxu0 %v759
    %761 = vmatprep.subr.mxu0 0.0
    %v762 = vand.u32 %v36, 4294901760
    %v763 = vsub.f32 %v36, %v762
    %v764 = vand.u32 %v763, 4294901760
    %765 = vmatpush1.msra.mxu0 %v764
    %766 = vmatprep.subr.mxu0 0.0
    %v767 = vand.u32 %v37, 4294901760
    %v768 = vsub.f32 %v37, %v767
    %v769 = vand.u32 %v768, 4294901760
    %770 = vmatpush1.msra.mxu0 %v769
    %771 = vmatprep.subr.mxu0 0.0
    %v772 = vand.u32 %v38, 4294901760
    %v773 = vsub.f32 %v38, %v772
    %v774 = vand.u32 %v773, 4294901760
    %775 = vmatpush1.msra.mxu0 %v774
    %776 = vmatprep.subr.mxu0 0.0
    %v777 = vand.u32 %v39, 4294901760
    %v778 = vsub.f32 %v39, %v777
    %v779 = vand.u32 %v778, 4294901760
    %780 = vmatpush1.msra.mxu0 %v779
    %781 = vmatprep.subr.mxu0 0.0
    %v782 = vand.u32 %v40, 4294901760
    %v783 = vsub.f32 %v40, %v782
    %v784 = vand.u32 %v783, 4294901760
    %785 = vmatpush1.msra.mxu0 %v784
    %786 = vmatprep.subr.mxu0 0.0
    %v787 = vand.u32 %v41, 4294901760
    %v788 = vsub.f32 %v41, %v787
    %v789 = vand.u32 %v788, 4294901760
    %790 = vmatpush1.msra.mxu0 %v789
    %791 = vmatprep.subr.mxu0 0.0
    %v792 = vand.u32 %v42, 4294901760
    %v793 = vsub.f32 %v42, %v792
    %v794 = vand.u32 %v793, 4294901760
    %795 = vmatpush1.msra.mxu0 %v794
    %796 = vmatprep.subr.mxu0 0.0
    %v797 = vand.u32 %v43, 4294901760
    %v798 = vsub.f32 %v43, %v797
    %v799 = vand.u32 %v798, 4294901760
    %800 = vmatpush1.msra.mxu0 %v799
    %801 = vmatprep.subr.mxu0 0.0
    %v802 = vand.u32 %v44, 4294901760
    %v803 = vsub.f32 %v44, %v802
    %v804 = vand.u32 %v803, 4294901760
    %805 = vmatpush1.msra.mxu0 %v804
    %v806 = vand.u32 %v53, 4294901760
    %807 = vmatprep.mubr.f32.mxu0 %v806
    %v808 = vand.u32 %v52, 4294901760
    %809 = vmatmul.mubr.f32.gmra.mrb[0].mxu0 %v808
    %v810 = vpop.f32.mrb[0].mxu0
    %v811 = vadd.f32 %v643, %v810
    %v812 = vpop.f32.mrb[0].mxu0
    %813 = vdwg.mxu0
    %814 = vmatprep.subr.mxu0 0.0
    %v815 = vand.u32 %v13, 4294901760
    %816 = vmatpush1.msra.mxu0 %v815
    %817 = vmatprep.subr.mxu0 0.0
    %v818 = vand.u32 %v14, 4294901760
    %819 = vmatpush1.msra.mxu0 %v818
    %820 = vmatprep.subr.mxu0 0.0
    %v821 = vand.u32 %v15, 4294901760
    %822 = vmatpush1.msra.mxu0 %v821
    %823 = vmatprep.subr.mxu0 0.0
    %v824 = vand.u32 %v16, 4294901760
    %825 = vmatpush1.msra.mxu0 %v824
    %826 = vmatprep.subr.mxu0 0.0
    %v827 = vand.u32 %v17, 4294901760
    %828 = vmatpush1.msra.mxu0 %v827
    %829 = vmatprep.subr.mxu0 0.0
    %v830 = vand.u32 %v18, 4294901760
    %831 = vmatpush1.msra.mxu0 %v830
    %832 = vmatprep.subr.mxu0 0.0
    %v833 = vand.u32 %v19, 4294901760
    %834 = vmatpush1.msra.mxu0 %v833
    %835 = vmatprep.subr.mxu0 0.0
    %v836 = vand.u32 %v20, 4294901760
    %837 = vmatpush1.msra.mxu0 %v836
    %838 = vmatprep.subr.mxu0 0.0
    %v839 = vand.u32 %v21, 4294901760
    %840 = vmatpush1.msra.mxu0 %v839
    %841 = vmatprep.subr.mxu0 0.0
    %v842 = vand.u32 %v22, 4294901760
    %843 = vmatpush1.msra.mxu0 %v842
    %844 = vmatprep.subr.mxu0 0.0
    %v845 = vand.u32 %v23, 4294901760
    %846 = vmatpush1.msra.mxu0 %v845
    %847 = vmatprep.subr.mxu0 0.0
    %v848 = vand.u32 %v24, 4294901760
    %849 = vmatpush1.msra.mxu0 %v848
    %850 = vmatprep.subr.mxu0 0.0
    %v851 = vand.u32 %v25, 4294901760
    %852 = vmatpush1.msra.mxu0 %v851
    %853 = vmatprep.subr.mxu0 0.0
    %v854 = vand.u32 %v26, 4294901760
    %855 = vmatpush1.msra.mxu0 %v854
    %856 = vmatprep.subr.mxu0 0.0
    %v857 = vand.u32 %v27, 4294901760
    %858 = vmatpush1.msra.mxu0 %v857
    %859 = vmatprep.subr.mxu0 0.0
    %v860 = vand.u32 %v28, 4294901760
    %861 = vmatpush1.msra.mxu0 %v860
    %862 = vmatprep.subr.mxu0 0.0
    %v863 = vand.u32 %v29, 4294901760
    %864 = vmatpush1.msra.mxu0 %v863
    %865 = vmatprep.subr.mxu0 0.0
    %v866 = vand.u32 %v30, 4294901760
    %867 = vmatpush1.msra.mxu0 %v866
    %868 = vmatprep.subr.mxu0 0.0
    %v869 = vand.u32 %v31, 4294901760
    %870 = vmatpush1.msra.mxu0 %v869
    %871 = vmatprep.subr.mxu0 0.0
    %v872 = vand.u32 %v32, 4294901760
    %873 = vmatpush1.msra.mxu0 %v872
    %874 = vmatprep.subr.mxu0 0.0
    %v875 = vand.u32 %v33, 4294901760
    %876 = vmatpush1.msra.mxu0 %v875
    %877 = vmatprep.subr.mxu0 0.0
    %v878 = vand.u32 %v34, 4294901760
    %879 = vmatpush1.msra.mxu0 %v878
    %880 = vmatprep.subr.mxu0 0.0
    %v881 = vand.u32 %v35, 4294901760
    %882 = vmatpush1.msra.mxu0 %v881
    %883 = vmatprep.subr.mxu0 0.0
    %v884 = vand.u32 %v36, 4294901760
    %885 = vmatpush1.msra.mxu0 %v884
    %886 = vmatprep.subr.mxu0 0.0
    %v887 = vand.u32 %v37, 4294901760
    %888 = vmatpush1.msra.mxu0 %v887
    %889 = vmatprep.subr.mxu0 0.0
    %v890 = vand.u32 %v38, 4294901760
    %891 = vmatpush1.msra.mxu0 %v890
    %892 = vmatprep.subr.mxu0 0.0
    %v893 = vand.u32 %v39, 4294901760
    %894 = vmatpush1.msra.mxu0 %v893
    %895 = vmatprep.subr.mxu0 0.0
    %v896 = vand.u32 %v40, 4294901760
    %897 = vmatpush1.msra.mxu0 %v896
    %898 = vmatprep.subr.mxu0 0.0
    %v899 = vand.u32 %v41, 4294901760
    %900 = vmatpush1.msra.mxu0 %v899
    %901 = vmatprep.subr.mxu0 0.0
    %v902 = vand.u32 %v42, 4294901760
    %903 = vmatpush1.msra.mxu0 %v902
    %904 = vmatprep.subr.mxu0 0.0
    %v905 = vand.u32 %v43, 4294901760
    %906 = vmatpush1.msra.mxu0 %v905
    %907 = vmatprep.subr.mxu0 0.0
    %v908 = vand.u32 %v44, 4294901760
    %909 = vmatpush1.msra.mxu0 %v908
    %v910 = vand.u32 %v53, 4294901760
    %911 = vmatprep.mubr.f32.mxu0 %v910
    %v912 = vand.u32 %v52, 4294901760
    %913 = vmatmul.mubr.f32.gmra.mrb[0].mxu0 %v912
    %v914 = vpop.f32.mrb[0].mxu0
    %v915 = vadd.f32 %v811, %v914
    %v916 = vpop.f32.mrb[0].mxu0
    %917 = vdwg.mxu0
    %v918 = vmul.f32 %v915, 0.03125
    %vm919 = vcmask 58368
    %v920 = vsel %vm919, %v918, -inf
    %921 = vmax.xlane.f32.xlu0 %v920
    %v922 = vpop.xlane.xlu0 %921
    %v923 = vsub.f32 %v918, %v922
    %v924 = vmul.f32 %v923, 1.442695
    %v925 = vpow.pop %v924
    %v926 = vsel %vm919, %v925, 0.0
    %927 = vadd.xlane.f32.xlu0 %v926
    %v928 = vpop.xlane.xlu0 %927
    %v929 = vrcp.pop %v928
    %v930 = vmul.f32 %v925, %v929
    %vm931 = vcmask 64512
    %v933 = vsel %vm931, %v930, 0
    %v936 = vsel %vm931, %v13, 0
    %v939 = vsel %vm931, %v14, 0
    %v942 = vsel %vm931, %v15, 0
    %v945 = vsel %vm931, %v16, 0
    %v948 = vsel %vm931, %v17, 0
    %v951 = vsel %vm931, %v18, 0
    %v954 = vsel %vm931, %v19, 0
    %v957 = vsel %vm931, %v20, 0
    %v960 = vsel %vm931, %v21, 0
    %v963 = vsel %vm931, %v22, 0
    %v966 = vsel %vm931, %v23, 0
    %v969 = vsel %vm931, %v24, 0
    %v972 = vsel %vm931, %v25, 0
    %v975 = vsel %vm931, %v26, 0
    %v978 = vsel %vm931, %v27, 0
    %v981 = vsel %vm931, %v28, 0
    %v984 = vsel %vm931, %v29, 0
    %v987 = vsel %vm931, %v30, 0
    %v990 = vsel %vm931, %v31, 0
    %v993 = vsel %vm931, %v32, 0
    %v996 = vsel %vm931, %v33, 0
    %v999 = vsel %vm931, %v34, 0
    %v1002 = vsel %vm931, %v35, 0
    %v1005 = vsel %vm931, %v36, 0
    %v1008 = vsel %vm931, %v37, 0
    %v1011 = vsel %vm931, %v38, 0
    %v1014 = vsel %vm931, %v39, 0
    %v1017 = vsel %vm931, %v40, 0
    %v1020 = vsel %vm931, %v41, 0
    %v1023 = vsel %vm931, %v42, 0
    %v1026 = vsel %vm931, %v43, 0
    %v1029 = vsel %vm931, %v44, 0
    %1031 = vmatprep.subr.mxu0 0.0
    %v1032 = vand.u32 %v936, 4294901760
    %1033 = vmatpush1.xpose.msra.mxu0 %v1032
    %1034 = vmatprep.subr.mxu0 0.0
    %v1035 = vand.u32 %v939, 4294901760
    %1036 = vmatpush1.xpose.msra.mxu0 %v1035
    %1037 = vmatprep.subr.mxu0 0.0
    %v1038 = vand.u32 %v942, 4294901760
    %1039 = vmatpush1.xpose.msra.mxu0 %v1038
    %1040 = vmatprep.subr.mxu0 0.0
    %v1041 = vand.u32 %v945, 4294901760
    %1042 = vmatpush1.xpose.msra.mxu0 %v1041
    %1043 = vmatprep.subr.mxu0 0.0
    %v1044 = vand.u32 %v948, 4294901760
    %1045 = vmatpush1.xpose.msra.mxu0 %v1044
    %1046 = vmatprep.subr.mxu0 0.0
    %v1047 = vand.u32 %v951, 4294901760
    %1048 = vmatpush1.xpose.msra.mxu0 %v1047
    %1049 = vmatprep.subr.mxu0 0.0
    %v1050 = vand.u32 %v954, 4294901760
    %1051 = vmatpush1.xpose.msra.mxu0 %v1050
    %1052 = vmatprep.subr.mxu0 0.0
    %v1053 = vand.u32 %v957, 4294901760
    %1054 = vmatpush1.xpose.msra.mxu0 %v1053
    %1055 = vmatprep.subr.mxu0 0.0
    %v1056 = vand.u32 %v960, 4294901760
    %1057 = vmatpush1.xpose.msra.mxu0 %v1056
    %1058 = vmatprep.subr.mxu0 0.0
    %v1059 = vand.u32 %v963, 4294901760
    %1060 = vmatpush1.xpose.msra.mxu0 %v1059
    %1061 = vmatprep.subr.mxu0 0.0
    %v1062 = vand.u32 %v966, 4294901760
    %1063 = vmatpush1.xpose.msra.mxu0 %v1062
    %1064 = vmatprep.subr.mxu0 0.0
    %v1065 = vand.u32 %v969, 4294901760
    %1066 = vmatpush1.xpose.msra.mxu0 %v1065
    %1067 = vmatprep.subr.mxu0 0.0
    %v1068 = vand.u32 %v972, 4294901760
    %1069 = vmatpush1.xpose.msra.mxu0 %v1068
    %1070 = vmatprep.subr.mxu0 0.0
    %v1071 = vand.u32 %v975, 4294901760
    %1072 = vmatpush1.xpose.msra.mxu0 %v1071
    %1073 = vmatprep.subr.mxu0 0.0
    %v1074 = vand.u32 %v978, 4294901760
    %1075 = vmatpush1.xpose.msra.mxu0 %v1074
    %1076 = vmatprep.subr.mxu0 0.0
    %v1077 = vand.u32 %v981, 4294901760
    %1078 = vmatpush1.xpose.msra.mxu0 %v1077
    %1079 = vmatprep.subr.mxu0 0.0
    %v1080 = vand.u32 %v984, 4294901760
    %1081 = vmatpush1.xpose.msra.mxu0 %v1080
    %1082 = vmatprep.subr.mxu0 0.0
    %v1083 = vand.u32 %v987, 4294901760
    %1084 = vmatpush1.xpose.msra.mxu0 %v1083
    %1085 = vmatprep.subr.mxu0 0.0
    %v1086 = vand.u32 %v990, 4294901760
    %1087 = vmatpush1.xpose.msra.mxu0 %v1086
    %1088 = vmatprep.subr.mxu0 0.0
    %v1089 = vand.u32 %v993, 4294901760
    %1090 = vmatpush1.xpose.msra.mxu0 %v1089
    %1091 = vmatprep.subr.mxu0 0.0
    %v1092 = vand.u32 %v996, 4294901760
    %1093 = vmatpush1.xpose.msra.mxu0 %v1092
    %1094 = vmatprep.subr.mxu0 0.0
    %v1095 = vand.u32 %v999, 4294901760
    %1096 = vmatpush1.xpose.msra.mxu0 %v1095
    %1097 = vmatprep.subr.mxu0 0.0
    %v1098 = vand.u32 %v1002, 4294901760
    %1099 = vmatpush1.xpose.msra.mxu0 %v1098
    %1100 = vmatprep.subr.mxu0 0.0
    %v1101 = vand.u32 %v1005, 4294901760
    %1102 = vmatpush1.xpose.msra.mxu0 %v1101
    %1103 = vmatprep.subr.mxu0 0.0
    %v1104 = vand.u32 %v1008, 4294901760
    %1105 = vmatpush1.xpose.msra.mxu0 %v1104
    %1106 = vmatprep.subr.mxu0 0.0
    %v1107 = vand.u32 %v1011, 4294901760
    %1108 = vmatpush1.xpose.msra.mxu0 %v1107
    %1109 = vmatprep.subr.mxu0 0.0
    %v1110 = vand.u32 %v1014, 4294901760
    %1111 = vmatpush1.xpose.msra.mxu0 %v1110
    %1112 = vmatprep.subr.mxu0 0.0
    %v1113 = vand.u32 %v1017, 4294901760
    %1114 = vmatpush1.xpose.msra.mxu0 %v1113
    %1115 = vmatprep.subr.mxu0 0.0
    %v1116 = vand.u32 %v1020, 4294901760
    %1117 = vmatpush1.xpose.msra.mxu0 %v1116
    %1118 = vmatprep.subr.mxu0 0.0
    %v1119 = vand.u32 %v1023, 4294901760
    %1120 = vmatpush1.xpose.msra.mxu0 %v1119
    %1121 = vmatprep.subr.mxu0 0.0
    %v1122 = vand.u32 %v1026, 4294901760
    %1123 = vmatpush1.xpose.msra.mxu0 %v1122
    %1124 = vmatprep.subr.mxu0 0.0
    %v1125 = vand.u32 %v1029, 4294901760
    %1126 = vmatpush1.xpose.msra.mxu0 %v1125
    %1127 = vmatprep.mubr.f32.mxu0 0.0
    %v1128 = vand.u32 %v933, 4294901760
    %v1129 = vsub.f32 %v933, %v1128
    %v1130 = vand.u32 %v1129, 4294901760
    %v1131 = vsub.f32 %v1129, %v1130
    %v1132 = vand.u32 %v1131, 4294901760
    %1133 = vmatmul.mubr.f32.gmra.mrb[0].mxu0 %v1132
    %v1134 = vpop.f32.mrb[0].mxu0
    %v1135 = vadd.f32 0.0, %v1134
    %v1136 = vpop.f32.mrb[0].mxu0
    %v1137 = vadd.f32 0.0, %v1136
    %1138 = vdwg.mxu0
    %1139 = vmatprep.subr.mxu0 0.0
    %v1140 = vand.u32 %v936, 4294901760
    %v1141 = vsub.f32 %v936, %v1140
    %v1142 = vand.u32 %v1141, 4294901760
    %v1143 = vsub.f32 %v1141, %v1142
    %v1144 = vand.u32 %v1143, 4294901760
    %1145 = vmatpush1.xpose.msra.mxu0 %v1144
    %1146 = vmatprep.subr.mxu0 0.0
    %v1147 = vand.u32 %v939, 4294901760
    %v1148 = vsub.f32 %v939, %v1147
    %v1149 = vand.u32 %v1148, 4294901760
    %v1150 = vsub.f32 %v1148, %v1149
    %v1151 = vand.u32 %v1150, 4294901760
    %1152 = vmatpush1.xpose.msra.mxu0 %v1151
    %1153 = vmatprep.subr.mxu0 0.0
    %v1154 = vand.u32 %v942, 4294901760
    %v1155 = vsub.f32 %v942, %v1154
    %v1156 = vand.u32 %v1155, 4294901760
    %v1157 = vsub.f32 %v1155, %v1156
    %v1158 = vand.u32 %v1157, 4294901760
    %1159 = vmatpush1.xpose.msra.mxu0 %v1158
    %1160 = vmatprep.subr.mxu0 0.0
    %v1161 = vand.u32 %v945, 4294901760
    %v1162 = vsub.f32 %v945, %v1161
    %v1163 = vand.u32 %v1162, 4294901760
    %v1164 = vsub.f32 %v1162, %v1163
    %v1165 = vand.u32 %v1164, 4294901760
    %1166 = vmatpush1.xpose.msra.mxu0 %v1165
    %1167 = vmatprep.subr.mxu0 0.0
    %v1168 = vand.u32 %v948, 4294901760
    %v1169 = vsub.f32 %v948, %v1168
    %v1170 = vand.u32 %v1169, 4294901760
    %v1171 = vsub.f32 %v1169, %v1170
    %v1172 = vand.u32 %v1171, 4294901760
    %1173 = vmatpush1.xpose.msra.mxu0 %v1172
    %1174 = vmatprep.subr.mxu0 0.0
    %v1175 = vand.u32 %v951, 4294901760
    %v1176 = vsub.f32 %v951, %v1175
    %v1177 = vand.u32 %v1176, 4294901760
    %v1178 = vsub.f32 %v1176, %v1177
    %v1179 = vand.u32 %v1178, 4294901760
    %1180 = vmatpush1.xpose.msra.mxu0 %v1179
    %1181 = vmatprep.subr.mxu0 0.0
    %v1182 = vand.u32 %v954, 4294901760
    %v1183 = vsub.f32 %v954, %v1182
    %v1184 = vand.u32 %v1183, 4294901760
    %v1185 = vsub.f32 %v1183, %v1184
    %v1186 = vand.u32 %v1185, 4294901760
    %1187 = vmatpush1.xpose.msra.mxu0 %v1186
    %1188 = vmatprep.subr.mxu0 0.0
    %v1189 = vand.u32 %v957, 4294901760
    %v1190 = vsub.f32 %v957, %v1189
    %v1191 = vand.u32 %v1190, 4294901760
    %v1192 = vsub.f32 %v1190, %v1191
    %v1193 = vand.u32 %v1192, 4294901760
    %1194 = vmatpush1.xpose.msra.mxu0 %v1193
    %1195 = vmatprep.subr.mxu0 0.0
    %v1196 = vand.u32 %v960, 4294901760
    %v1197 = vsub.f32 %v960, %v1196
    %v1198 = vand.u32 %v1197, 4294901760
    %v1199 = vsub.f32 %v1197, %v1198
    %v1200 = vand.u32 %v1199, 4294901760
    %1201 = vmatpush1.xpose.msra.mxu0 %v1200
    %1202 = vmatprep.subr.mxu0 0.0
    %v1203 = vand.u32 %v963, 4294901760
    %v1204 = vsub.f32 %v963, %v1203
    %v1205 = vand.u32 %v1204, 4294901760
    %v1206 = vsub.f32 %v1204, %v1205
    %v1207 = vand.u32 %v1206, 4294901760
    %1208 = vmatpush1.xpose.msra.mxu0 %v1207
    %1209 = vmatprep.subr.mxu0 0.0
    %v1210 = vand.u32 %v966, 4294901760
    %v1211 = vsub.f32 %v966, %v1210
    %v1212 = vand.u32 %v1211, 4294901760
    %v1213 = vsub.f32 %v1211, %v1212
    %v1214 = vand.u32 %v1213, 4294901760
    %1215 = vmatpush1.xpose.msra.mxu0 %v1214
    %1216 = vmatprep.subr.mxu0 0.0
    %v1217 = vand.u32 %v969, 4294901760
    %v1218 = vsub.f32 %v969, %v1217
    %v1219 = vand.u32 %v1218, 4294901760
    %v1220 = vsub.f32 %v1218, %v1219
    %v1221 = vand.u32 %v1220, 4294901760
    %1222 = vmatpush1.xpose.msra.mxu0 %v1221
    %1223 = vmatprep.subr.mxu0 0.0
    %v1224 = vand.u32 %v972, 4294901760
    %v1225 = vsub.f32 %v972, %v1224
    %v1226 = vand.u32 %v1225, 4294901760
    %v1227 = vsub.f32 %v1225, %v1226
    %v1228 = vand.u32 %v1227, 4294901760
    %1229 = vmatpush1.xpose.msra.mxu0 %v1228
    %1230 = vmatprep.subr.mxu0 0.0
    %v1231 = vand.u32 %v975, 4294901760
    %v1232 = vsub.f32 %v975, %v1231
    %v1233 = vand.u32 %v1232, 4294901760
    %v1234 = vsub.f32 %v1232, %v1233
    %v1235 = vand.u32 %v1234, 4294901760
    %1236 = vmatpush1.xpose.msra.mxu0 %v1235
    %1237 = vmatprep.subr.mxu0 0.0
    %v1238 = vand.u32 %v978, 4294901760
    %v1239 = vsub.f32 %v978, %v1238
    %v1240 = vand.u32 %v1239, 4294901760
    %v1241 = vsub.f32 %v1239, %v1240
    %v1242 = vand.u32 %v1241, 4294901760
    %1243 = vmatpush1.xpose.msra.mxu0 %v1242
    %1244 = vmatprep.subr.mxu0 0.0
    %v1245 = vand.u32 %v981, 4294901760
    %v1246 = vsub.f32 %v981, %v1245
    %v1247 = vand.u32 %v1246, 4294901760
    %v1248 = vsub.f32 %v1246, %v1247
    %v1249 = vand.u32 %v1248, 4294901760
    %1250 = vmatpush1.xpose.msra.mxu0 %v1249
    %1251 = vmatprep.subr.mxu0 0.0
    %v1252 = vand.u32 %v984, 4294901760
    %v1253 = vsub.f32 %v984, %v1252
    %v1254 = vand.u32 %v1253, 4294901760
    %v1255 = vsub.f32 %v1253, %v1254
    %v1256 = vand.u32 %v1255, 4294901760
    %1257 = vmatpush1.xpose.msra.mxu0 %v1256
    %1258 = vmatprep.subr.mxu0 0.0
    %v1259 = vand.u32 %v987, 4294901760
    %v1260 = vsub.f32 %v987, %v1259
    %v1261 = vand.u32 %v1260, 4294901760
    %v1262 = vsub.f32 %v1260, %v1261
    %v1263 = vand.u32 %v1262, 4294901760
    %1264 = vmatpush1.xpose.msra.mxu0 %v1263
    %1265 = vmatprep.subr.mxu0 0.0
    %v1266 = vand.u32 %v990, 4294901760
    %v1267 = vsub.f32 %v990, %v1266
    %v1268 = vand.u32 %v1267, 4294901760
    %v1269 = vsub.f32 %v1267, %v1268
    %v1270 = vand.u32 %v1269, 4294901760
    %1271 = vmatpush1.xpose.msra.mxu0 %v1270
    %1272 = vmatprep.subr.mxu0 0.0
    %v1273 = vand.u32 %v993, 4294901760
    %v1274 = vsub.f32 %v993, %v1273
    %v1275 = vand.u32 %v1274, 4294901760
    %v1276 = vsub.f32 %v1274, %v1275
    %v1277 = vand.u32 %v1276, 4294901760
    %1278 = vmatpush1.xpose.msra.mxu0 %v1277
    %1279 = vmatprep.subr.mxu0 0.0
    %v1280 = vand.u32 %v996, 4294901760
    %v1281 = vsub.f32 %v996, %v1280
    %v1282 = vand.u32 %v1281, 4294901760
    %v1283 = vsub.f32 %v1281, %v1282
    %v1284 = vand.u32 %v1283, 4294901760
    %1285 = vmatpush1.xpose.msra.mxu0 %v1284
    %1286 = vmatprep.subr.mxu0 0.0
    %v1287 = vand.u32 %v999, 4294901760
    %v1288 = vsub.f32 %v999, %v1287
    %v1289 = vand.u32 %v1288, 4294901760
    %v1290 = vsub.f32 %v1288, %v1289
    %v1291 = vand.u32 %v1290, 4294901760
    %1292 = vmatpush1.xpose.msra.mxu0 %v1291
    %1293 = vmatprep.subr.mxu0 0.0
    %v1294 = vand.u32 %v1002, 4294901760
    %v1295 = vsub.f32 %v1002, %v1294
    %v1296 = vand.u32 %v1295, 4294901760
    %v1297 = vsub.f32 %v1295, %v1296
    %v1298 = vand.u32 %v1297, 4294901760
    %1299 = vmatpush1.xpose.msra.mxu0 %v1298
    %1300 = vmatprep.subr.mxu0 0.0
    %v1301 = vand.u32 %v1005, 4294901760
    %v1302 = vsub.f32 %v1005, %v1301
    %v1303 = vand.u32 %v1302, 4294901760
    %v1304 = vsub.f32 %v1302, %v1303
    %v1305 = vand.u32 %v1304, 4294901760
    %1306 = vmatpush1.xpose.msra.mxu0 %v1305
    %1307 = vmatprep.subr.mxu0 0.0
    %v1308 = vand.u32 %v1008, 4294901760
    %v1309 = vsub.f32 %v1008, %v1308
    %v1310 = vand.u32 %v1309, 4294901760
    %v1311 = vsub.f32 %v1309, %v1310
    %v1312 = vand.u32 %v1311, 4294901760
    %1313 = vmatpush1.xpose.msra.mxu0 %v1312
    %1314 = vmatprep.subr.mxu0 0.0
    %v1315 = vand.u32 %v1011, 4294901760
    %v1316 = vsub.f32 %v1011, %v1315
    %v1317 = vand.u32 %v1316, 4294901760
    %v1318 = vsub.f32 %v1316, %v1317
    %v1319 = vand.u32 %v1318, 4294901760
    %1320 = vmatpush1.xpose.msra.mxu0 %v1319
    %1321 = vmatprep.subr.mxu0 0.0
    %v1322 = vand.u32 %v1014, 4294901760
    %v1323 = vsub.f32 %v1014, %v1322
    %v1324 = vand.u32 %v1323, 4294901760
    %v1325 = vsub.f32 %v1323, %v1324
    %v1326 = vand.u32 %v1325, 4294901760
    %1327 = vmatpush1.xpose.msra.mxu0 %v1326
    %1328 = vmatprep.subr.mxu0 0.0
    %v1329 = vand.u32 %v1017, 4294901760
    %v1330 = vsub.f32 %v1017, %v1329
    %v1331 = vand.u32 %v1330, 4294901760
    %v1332 = vsub.f32 %v1330, %v1331
    %v1333 = vand.u32 %v1332, 4294901760
    %1334 = vmatpush1.xpose.msra.mxu0 %v1333
    %1335 = vmatprep.subr.mxu0 0.0
    %v1336 = vand.u32 %v1020, 4294901760
    %v1337 = vsub.f32 %v1020, %v1336
    %v1338 = vand.u32 %v1337, 4294901760
    %v1339 = vsub.f32 %v1337, %v1338
    %v1340 = vand.u32 %v1339, 4294901760
    %1341 = vmatpush1.xpose.msra.mxu0 %v1340
    %1342 = vmatprep.subr.mxu0 0.0
    %v1343 = vand.u32 %v1023, 4294901760
    %v1344 = vsub.f32 %v1023, %v1343
    %v1345 = vand.u32 %v1344, 4294901760
    %v1346 = vsub.f32 %v1344, %v1345
    %v1347 = vand.u32 %v1346, 4294901760
    %1348 = vmatpush1.xpose.msra.mxu0 %v1347
    %1349 = vmatprep.subr.mxu0 0.0
    %v1350 = vand.u32 %v1026, 4294901760
    %v1351 = vsub.f32 %v1026, %v1350
    %v1352 = vand.u32 %v1351, 4294901760
    %v1353 = vsub.f32 %v1351, %v1352
    %v1354 = vand.u32 %v1353, 4294901760
    %1355 = vmatpush1.xpose.msra.mxu0 %v1354
    %1356 = vmatprep.subr.mxu0 0.0
    %v1357 = vand.u32 %v1029, 4294901760
    %v1358 = vsub.f32 %v1029, %v1357
    %v1359 = vand.u32 %v1358, 4294901760
    %v1360 = vsub.f32 %v1358, %v1359
    %v1361 = vand.u32 %v1360, 4294901760
    %1362 = vmatpush1.xpose.msra.mxu0 %v1361
    %1363 = vmatprep.mubr.f32.mxu0 0.0
    %v1364 = vand.u32 %v933, 4294901760
    %1365 = vmatmul.mubr.f32.gmra.mrb[0].mxu0 %v1364
    %v1366 = vpop.f32.mrb[0].mxu0
    %v1367 = vadd.f32 %v1135, %v1366
    %v1368 = vpop.f32.mrb[0].mxu0
    %v1369 = vadd.f32 %v1137, %v1368
    %1370 = vdwg.mxu0
    %1371 = vmatprep.subr.mxu0 0.0
    %v1372 = vand.u32 %v936, 4294901760
    %v1373 = vsub.f32 %v936, %v1372
    %1374 = vmatpush1.xpose.msra.mxu0 %v1373
    %1375 = vmatprep.subr.mxu0 0.0
    %v1376 = vand.u32 %v939, 4294901760
    %v1377 = vsub.f32 %v939, %v1376
    %1378 = vmatpush1.xpose.msra.mxu0 %v1377
    %1379 = vmatprep.subr.mxu0 0.0
    %v1380 = vand.u32 %v942, 4294901760
    %v1381 = vsub.f32 %v942, %v1380
    %1382 = vmatpush1.xpose.msra.mxu0 %v1381
    %1383 = vmatprep.subr.mxu0 0.0
    %v1384 = vand.u32 %v945, 4294901760
    %v1385 = vsub.f32 %v945, %v1384
    %1386 = vmatpush1.xpose.msra.mxu0 %v1385
    %1387 = vmatprep.subr.mxu0 0.0
    %v1388 = vand.u32 %v948, 4294901760
    %v1389 = vsub.f32 %v948, %v1388
    %1390 = vmatpush1.xpose.msra.mxu0 %v1389
    %1391 = vmatprep.subr.mxu0 0.0
    %v1392 = vand.u32 %v951, 4294901760
    %v1393 = vsub.f32 %v951, %v1392
    %1394 = vmatpush1.xpose.msra.mxu0 %v1393
    %1395 = vmatprep.subr.mxu0 0.0
    %v1396 = vand.u32 %v954, 4294901760
    %v1397 = vsub.f32 %v954, %v1396
    %1398 = vmatpush1.xpose.msra.mxu0 %v1397
    %1399 = vmatprep.subr.mxu0 0.0
    %v1400 = vand.u32 %v957, 4294901760
    %v1401 = vsub.f32 %v957, %v1400
    %1402 = vmatpush1.xpose.msra.mxu0 %v1401
    %1403 = vmatprep.subr.mxu0 0.0
    %v1404 = vand.u32 %v960, 4294901760
    %v1405 = vsub.f32 %v960, %v1404
    %1406 = vmatpush1.xpose.msra.mxu0 %v1405
    %1407 = vmatprep.subr.mxu0 0.0
    %v1408 = vand.u32 %v963, 4294901760
    %v1409 = vsub.f32 %v963, %v1408
    %1410 = vmatpush1.xpose.msra.mxu0 %v1409
    %1411 = vmatprep.subr.mxu0 0.0
    %v1412 = vand.u32 %v966, 4294901760
    %v1413 = vsub.f32 %v966, %v1412
    %1414 = vmatpush1.xpose.msra.mxu0 %v1413
    %1415 = vmatprep.subr.mxu0 0.0
    %v1416 = vand.u32 %v969, 4294901760
    %v1417 = vsub.f32 %v969, %v1416
    %1418 = vmatpush1.xpose.msra.mxu0 %v1417
    %1419 = vmatprep.subr.mxu0 0.0
    %v1420 = vand.u32 %v972, 4294901760
    %v1421 = vsub.f32 %v972, %v1420
    %1422 = vmatpush1.xpose.msra.mxu0 %v1421
    %1423 = vmatprep.subr.mxu0 0.0
    %v1424 = vand.u32 %v975, 4294901760
    %v1425 = vsub.f32 %v975, %v1424
    %1426 = vmatpush1.xpose.msra.mxu0 %v1425
    %1427 = vmatprep.subr.mxu0 0.0
    %v1428 = vand.u32 %v978, 4294901760
    %v1429 = vsub.f32 %v978, %v1428
    %1430 = vmatpush1.xpose.msra.mxu0 %v1429
    %1431 = vmatprep.subr.mxu0 0.0
    %v1432 = vand.u32 %v981, 4294901760
    %v1433 = vsub.f32 %v981, %v1432
    %1434 = vmatpush1.xpose.msra.mxu0 %v1433
    %1435 = vmatprep.subr.mxu0 0.0
    %v1436 = vand.u32 %v984, 4294901760
    %v1437 = vsub.f32 %v984, %v1436
    %1438 = vmatpush1.xpose.msra.mxu0 %v1437
    %1439 = vmatprep.subr.mxu0 0.0
    %v1440 = vand.u32 %v987, 4294901760
    %v1441 = vsub.f32 %v987, %v1440
    %1442 = vmatpush1.xpose.msra.mxu0 %v1441
    %1443 = vmatprep.subr.mxu0 0.0
    %v1444 = vand.u32 %v990, 4294901760
    %v1445 = vsub.f32 %v990, %v1444
    %1446 = vmatpush1.xpose.msra.mxu0 %v1445
    %1447 = vmatprep.subr.mxu0 0.0
    %v1448 = vand.u32 %v993, 4294901760
    %v1449 = vsub.f32 %v993, %v1448
    %1450 = vmatpush1.xpose.msra.mxu0 %v1449
    %1451 = vmatprep.subr.mxu0 0.0
    %v1452 = vand.u32 %v996, 4294901760
    %v1453 = vsub.f32 %v996, %v1452
    %1454 = vmatpush1.xpose.msra.mxu0 %v1453
    %1455 = vmatprep.subr.mxu0 0.0
    %v1456 = vand.u32 %v999, 4294901760
    %v1457 = vsub.f32 %v999, %v1456
    %1458 = vmatpush1.xpose.msra.mxu0 %v1457
    %1459 = vmatprep.subr.mxu0 0.0
    %v1460 = vand.u32 %v1002, 4294901760
    %v1461 = vsub.f32 %v1002, %v1460
    %1462 = vmatpush1.xpose.msra.mxu0 %v1461
    %1463 = vmatprep.subr.mxu0 0.0
    %v1464 = vand.u32 %v1005, 4294901760
    %v1465 = vsub.f32 %v1005, %v1464
    %1466 = vmatpush1.xpose.msra.mxu0 %v1465
    %1467 = vmatprep.subr.mxu0 0.0
    %v1468 = vand.u32 %v1008, 4294901760
    %v1469 = vsub.f32 %v1008, %v1468
    %1470 = vmatpush1.xpose.msra.mxu0 %v1469
    %1471 = vmatprep.subr.mxu0 0.0
    %v1472 = vand.u32 %v1011, 4294901760
    %v1473 = vsub.f32 %v1011, %v1472
    %1474 = vmatpush1.xpose.msra.mxu0 %v1473
    %1475 = vmatprep.subr.mxu0 0.0
    %v1476 = vand.u32 %v1014, 4294901760
    %v1477 = vsub.f32 %v1014, %v1476
    %1478 = vmatpush1.xpose.msra.mxu0 %v1477
    %1479 = vmatprep.subr.mxu0 0.0
    %v1480 = vand.u32 %v1017, 4294901760
    %v1481 = vsub.f32 %v1017, %v1480
    %1482 = vmatpush1.xpose.msra.mxu0 %v1481
    %1483 = vmatprep.subr.mxu0 0.0
    %v1484 = vand.u32 %v1020, 4294901760
    %v1485 = vsub.f32 %v1020, %v1484
    %1486 = vmatpush1.xpose.msra.mxu0 %v1485
    %1487 = vmatprep.subr.mxu0 0.0
    %v1488 = vand.u32 %v1023, 4294901760
    %v1489 = vsub.f32 %v1023, %v1488
    %1490 = vmatpush1.xpose.msra.mxu0 %v1489
    %1491 = vmatprep.subr.mxu0 0.0
    %v1492 = vand.u32 %v1026, 4294901760
    %v1493 = vsub.f32 %v1026, %v1492
    %1494 = vmatpush1.xpose.msra.mxu0 %v1493
    %1495 = vmatprep.subr.mxu0 0.0
    %v1496 = vand.u32 %v1029, 4294901760
    %v1497 = vsub.f32 %v1029, %v1496
    %1498 = vmatpush1.xpose.msra.mxu0 %v1497
    %1499 = vmatprep.mubr.f32.mxu0 0.0
    %v1500 = vand.u32 %v933, 4294901760
    %v1501 = vsub.f32 %v933, %v1500
    %1502 = vmatmul.mubr.f32.gmra.mrb[0].mxu0 %v1501
    %v1503 = vpop.f32.mrb[0].mxu0
    %v1504 = vadd.f32 %v1367, %v1503
    %v1505 = vpop.f32.mrb[0].mxu0
    %v1506 = vadd.f32 %v1369, %v1505
    %1507 = vdwg.mxu0
    %1508 = vmatprep.subr.mxu0 0.0
    %v1509 = vand.u32 %v936, 4294901760
    %1510 = vmatpush1.xpose.msra.mxu0 %v1509
    %1511 = vmatprep.subr.mxu0 0.0
    %v1512 = vand.u32 %v939, 4294901760
    %1513 = vmatpush1.xpose.msra.mxu0 %v1512
    %1514 = vmatprep.subr.mxu0 0.0
    %v1515 = vand.u32 %v942, 4294901760
    %1516 = vmatpush1.xpose.msra.mxu0 %v1515
    %1517 = vmatprep.subr.mxu0 0.0
    %v1518 = vand.u32 %v945, 4294901760
    %1519 = vmatpush1.xpose.msra.mxu0 %v1518
    %1520 = vmatprep.subr.mxu0 0.0
    %v1521 = vand.u32 %v948, 4294901760
    %1522 = vmatpush1.xpose.msra.mxu0 %v1521
    %1523 = vmatprep.subr.mxu0 0.0
    %v1524 = vand.u32 %v951, 4294901760
    %1525 = vmatpush1.xpose.msra.mxu0 %v1524
    %1526 = vmatprep.subr.mxu0 0.0
    %v1527 = vand.u32 %v954, 4294901760
    %1528 = vmatpush1.xpose.msra.mxu0 %v1527
    %1529 = vmatprep.subr.mxu0 0.0
    %v1530 = vand.u32 %v957, 4294901760
    %1531 = vmatpush1.xpose.msra.mxu0 %v1530
    %1532 = vmatprep.subr.mxu0 0.0
    %v1533 = vand.u32 %v960, 4294901760
    %1534 = vmatpush1.xpose.msra.mxu0 %v1533
    %1535 = vmatprep.subr.mxu0 0.0
    %v1536 = vand.u32 %v963, 4294901760
    %1537 = vmatpush1.xpose.msra.mxu0 %v1536
    %1538 = vmatprep.subr.mxu0 0.0
    %v1539 = vand.u32 %v966, 4294901760
    %1540 = vmatpush1.xpose.msra.mxu0 %v1539
    %1541 = vmatprep.subr.mxu0 0.0
    %v1542 = vand.u32 %v969, 4294901760
    %1543 = vmatpush1.xpose.msra.mxu0 %v1542
    %1544 = vmatprep.subr.mxu0 0.0
    %v1545 = vand.u32 %v972, 4294901760
    %1546 = vmatpush1.xpose.msra.mxu0 %v1545
    %1547 = vmatprep.subr.mxu0 0.0
    %v1548 = vand.u32 %v975, 4294901760
    %1549 = vmatpush1.xpose.msra.mxu0 %v1548
    %1550 = vmatprep.subr.mxu0 0.0
    %v1551 = vand.u32 %v978, 4294901760
    %1552 = vmatpush1.xpose.msra.mxu0 %v1551
    %1553 = vmatprep.subr.mxu0 0.0
    %v1554 = vand.u32 %v981, 4294901760
    %1555 = vmatpush1.xpose.msra.mxu0 %v1554
    %1556 = vmatprep.subr.mxu0 0.0
    %v1557 = vand.u32 %v984, 4294901760
    %1558 = vmatpush1.xpose.msra.mxu0 %v1557
    %1559 = vmatprep.subr.mxu0 0.0
    %v1560 = vand.u32 %v987, 4294901760
    %1561 = vmatpush1.xpose.msra.mxu0 %v1560
    %1562 = vmatprep.subr.mxu0 0.0
    %v1563 = vand.u32 %v990, 4294901760
    %1564 = vmatpush1.xpose.msra.mxu0 %v1563
    %1565 = vmatprep.subr.mxu0 0.0
    %v1566 = vand.u32 %v993, 4294901760
    %1567 = vmatpush1.xpose.msra.mxu0 %v1566
    %1568 = vmatprep.subr.mxu0 0.0
    %v1569 = vand.u32 %v996, 4294901760
    %1570 = vmatpush1.xpose.msra.mxu0 %v1569
    %1571 = vmatprep.subr.mxu0 0.0
    %v1572 = vand.u32 %v999, 4294901760
    %1573 = vmatpush1.xpose.msra.mxu0 %v1572
    %1574 = vmatprep.subr.mxu0 0.0
    %v1575 = vand.u32 %v1002, 4294901760
    %1576 = vmatpush1.xpose.msra.mxu0 %v1575
    %1577 = vmatprep.subr.mxu0 0.0
    %v1578 = vand.u32 %v1005, 4294901760
    %1579 = vmatpush1.xpose.msra.mxu0 %v1578
    %1580 = vmatprep.subr.mxu0 0.0
    %v1581 = vand.u32 %v1008, 4294901760
    %1582 = vmatpush1.xpose.msra.mxu0 %v1581
    %1583 = vmatprep.subr.mxu0 0.0
    %v1584 = vand.u32 %v1011, 4294901760
    %1585 = vmatpush1.xpose.msra.mxu0 %v1584
    %1586 = vmatprep.subr.mxu0 0.0
    %v1587 = vand.u32 %v1014, 4294901760
    %1588 = vmatpush1.xpose.msra.mxu0 %v1587
    %1589 = vmatprep.subr.mxu0 0.0
    %v1590 = vand.u32 %v1017, 4294901760
    %1591 = vmatpush1.xpose.msra.mxu0 %v1590
    %1592 = vmatprep.subr.mxu0 0.0
    %v1593 = vand.u32 %v1020, 4294901760
    %1594 = vmatpush1.xpose.msra.mxu0 %v1593
    %1595 = vmatprep.subr.mxu0 0.0
    %v1596 = vand.u32 %v1023, 4294901760
    %1597 = vmatpush1.xpose.msra.mxu0 %v1596
    %1598 = vmatprep.subr.mxu0 0.0
    %v1599 = vand.u32 %v1026, 4294901760
    %1600 = vmatpush1.xpose.msra.mxu0 %v1599
    %1601 = vmatprep.subr.mxu0 0.0
    %v1602 = vand.u32 %v1029, 4294901760
    %1603 = vmatpush1.xpose.msra.mxu0 %v1602
    %1604 = vmatprep.mubr.f32.mxu0 0.0
    %v1605 = vand.u32 %v933, 4294901760
    %v1606 = vsub.f32 %v933, %v1605
    %v1607 = vand.u32 %v1606, 4294901760
    %1608 = vmatmul.mubr.f32.gmra.mrb[0].mxu0 %v1607
    %v1609 = vpop.f32.mrb[0].mxu0
    %v1610 = vadd.f32 %v1504, %v1609
    %v1611 = vpop.f32.mrb[0].mxu0
    %v1612 = vadd.f32 %v1506, %v1611
    %1613 = vdwg.mxu0
    %1614 = vmatprep.subr.mxu0 0.0
    %v1615 = vand.u32 %v936, 4294901760
    %v1616 = vsub.f32 %v936, %v1615
    %v1617 = vand.u32 %v1616, 4294901760
    %1618 = vmatpush1.xpose.msra.mxu0 %v1617
    %1619 = vmatprep.subr.mxu0 0.0
    %v1620 = vand.u32 %v939, 4294901760
    %v1621 = vsub.f32 %v939, %v1620
    %v1622 = vand.u32 %v1621, 4294901760
    %1623 = vmatpush1.xpose.msra.mxu0 %v1622
    %1624 = vmatprep.subr.mxu0 0.0
    %v1625 = vand.u32 %v942, 4294901760
    %v1626 = vsub.f32 %v942, %v1625
    %v1627 = vand.u32 %v1626, 4294901760
    %1628 = vmatpush1.xpose.msra.mxu0 %v1627
    %1629 = vmatprep.subr.mxu0 0.0
    %v1630 = vand.u32 %v945, 4294901760
    %v1631 = vsub.f32 %v945, %v1630
    %v1632 = vand.u32 %v1631, 4294901760
    %1633 = vmatpush1.xpose.msra.mxu0 %v1632
    %1634 = vmatprep.subr.mxu0 0.0
    %v1635 = vand.u32 %v948, 4294901760
    %v1636 = vsub.f32 %v948, %v1635
    %v1637 = vand.u32 %v1636, 4294901760
    %1638 = vmatpush1.xpose.msra.mxu0 %v1637
    %1639 = vmatprep.subr.mxu0 0.0
    %v1640 = vand.u32 %v951, 4294901760
    %v1641 = vsub.f32 %v951, %v1640
    %v1642 = vand.u32 %v1641, 4294901760
    %1643 = vmatpush1.xpose.msra.mxu0 %v1642
    %1644 = vmatprep.subr.mxu0 0.0
    %v1645 = vand.u32 %v954, 4294901760
    %v1646 = vsub.f32 %v954, %v1645
    %v1647 = vand.u32 %v1646, 4294901760
    %1648 = vmatpush1.xpose.msra.mxu0 %v1647
    %1649 = vmatprep.subr.mxu0 0.0
    %v1650 = vand.u32 %v957, 4294901760
    %v1651 = vsub.f32 %v957, %v1650
    %v1652 = vand.u32 %v1651, 4294901760
    %1653 = vmatpush1.xpose.msra.mxu0 %v1652
    %1654 = vmatprep.subr.mxu0 0.0
    %v1655 = vand.u32 %v960, 4294901760
    %v1656 = vsub.f32 %v960, %v1655
    %v1657 = vand.u32 %v1656, 4294901760
    %1658 = vmatpush1.xpose.msra.mxu0 %v1657
    %1659 = vmatprep.subr.mxu0 0.0
    %v1660 = vand.u32 %v963, 4294901760
    %v1661 = vsub.f32 %v963, %v1660
    %v1662 = vand.u32 %v1661, 4294901760
    %1663 = vmatpush1.xpose.msra.mxu0 %v1662
    %1664 = vmatprep.subr.mxu0 0.0
    %v1665 = vand.u32 %v966, 4294901760
    %v1666 = vsub.f32 %v966, %v1665
    %v1667 = vand.u32 %v1666, 4294901760
    %1668 = vmatpush1.xpose.msra.mxu0 %v1667
    %1669 = vmatprep.subr.mxu0 0.0
    %v1670 = vand.u32 %v969, 4294901760
    %v1671 = vsub.f32 %v969, %v1670
    %v1672 = vand.u32 %v1671, 4294901760
    %1673 = vmatpush1.xpose.msra.mxu0 %v1672
    %1674 = vmatprep.subr.mxu0 0.0
    %v1675 = vand.u32 %v972, 4294901760
    %v1676 = vsub.f32 %v972, %v1675
    %v1677 = vand.u32 %v1676, 4294901760
    %1678 = vmatpush1.xpose.msra.mxu0 %v1677
    %1679 = vmatprep.subr.mxu0 0.0
    %v1680 = vand.u32 %v975, 4294901760
    %v1681 = vsub.f32 %v975, %v1680
    %v1682 = vand.u32 %v1681, 4294901760
    %1683 = vmatpush1.xpose.msra.mxu0 %v1682
    %1684 = vmatprep.subr.mxu0 0.0
    %v1685 = vand.u32 %v978, 4294901760
    %v1686 = vsub.f32 %v978, %v1685
    %v1687 = vand.u32 %v1686, 4294901760
    %1688 = vmatpush1.xpose.msra.mxu0 %v1687
    %1689 = vmatprep.subr.mxu0 0.0
    %v1690 = vand.u32 %v981, 4294901760
    %v1691 = vsub.f32 %v981, %v1690
    %v1692 = vand.u32 %v1691, 4294901760
    %1693 = vmatpush1.xpose.msra.mxu0 %v1692
    %1694 = vmatprep.subr.mxu0 0.0
    %v1695 = vand.u32 %v984, 4294901760
    %v1696 = vsub.f32 %v984, %v1695
    %v1697 = vand.u32 %v1696, 4294901760
    %1698 = vmatpush1.xpose.msra.mxu0 %v1697
    %1699 = vmatprep.subr.mxu0 0.0
    %v1700 = vand.u32 %v987, 4294901760
    %v1701 = vsub.f32 %v987, %v1700
    %v1702 = vand.u32 %v1701, 4294901760
    %1703 = vmatpush1.xpose.msra.mxu0 %v1702
    %1704 = vmatprep.subr.mxu0 0.0
    %v1705 = vand.u32 %v990, 4294901760
    %v1706 = vsub.f32 %v990, %v1705
    %v1707 = vand.u32 %v1706, 4294901760
    %1708 = vmatpush1.xpose.msra.mxu0 %v1707
    %1709 = vmatprep.subr.mxu0 0.0
    %v1710 = vand.u32 %v993, 4294901760
    %v1711 = vsub.f32 %v993, %v1710
    %v1712 = vand.u32 %v1711, 4294901760
    %1713 = vmatpush1.xpose.msra.mxu0 %v1712
    %1714 = vmatprep.subr.mxu0 0.0
    %v1715 = vand.u32 %v996, 4294901760
    %v1716 = vsub.f32 %v996, %v1715
    %v1717 = vand.u32 %v1716, 4294901760
    %1718 = vmatpush1.xpose.msra.mxu0 %v1717
    %1719 = vmatprep.subr.mxu0 0.0
    %v1720 = vand.u32 %v999, 4294901760
    %v1721 = vsub.f32 %v999, %v1720
    %v1722 = vand.u32 %v1721, 4294901760
    %1723 = vmatpush1.xpose.msra.mxu0 %v1722
    %1724 = vmatprep.subr.mxu0 0.0
    %v1725 = vand.u32 %v1002, 4294901760
    %v1726 = vsub.f32 %v1002, %v1725
    %v1727 = vand.u32 %v1726, 4294901760
    %1728 = vmatpush1.xpose.msra.mxu0 %v1727
    %1729 = vmatprep.subr.mxu0 0.0
    %v1730 = vand.u32 %v1005, 4294901760
    %v1731 = vsub.f32 %v1005, %v1730
    %v1732 = vand.u32 %v1731, 4294901760
    %1733 = vmatpush1.xpose.msra.mxu0 %v1732
    %1734 = vmatprep.subr.mxu0 0.0
    %v1735 = vand.u32 %v1008, 4294901760
    %v1736 = vsub.f32 %v1008, %v1735
    %v1737 = vand.u32 %v1736, 4294901760
    %1738 = vmatpush1.xpose.msra.mxu0 %v1737
    %1739 = vmatprep.subr.mxu0 0.0
    %v1740 = vand.u32 %v1011, 4294901760
    %v1741 = vsub.f32 %v1011, %v1740
    %v1742 = vand.u32 %v1741, 4294901760
    %1743 = vmatpush1.xpose.msra.mxu0 %v1742
    %1744 = vmatprep.subr.mxu0 0.0
    %v1745 = vand.u32 %v1014, 4294901760
    %v1746 = vsub.f32 %v1014, %v1745
    %v1747 = vand.u32 %v1746, 4294901760
    %1748 = vmatpush1.xpose.msra.mxu0 %v1747
    %1749 = vmatprep.subr.mxu0 0.0
    %v1750 = vand.u32 %v1017, 4294901760
    %v1751 = vsub.f32 %v1017, %v1750
    %v1752 = vand.u32 %v1751, 4294901760
    %1753 = vmatpush1.xpose.msra.mxu0 %v1752
    %1754 = vmatprep.subr.mxu0 0.0
    %v1755 = vand.u32 %v1020, 4294901760
    %v1756 = vsub.f32 %v1020, %v1755
    %v1757 = vand.u32 %v1756, 4294901760
    %1758 = vmatpush1.xpose.msra.mxu0 %v1757
    %1759 = vmatprep.subr.mxu0 0.0
    %v1760 = vand.u32 %v1023, 4294901760
    %v1761 = vsub.f32 %v1023, %v1760
    %v1762 = vand.u32 %v1761, 4294901760
    %1763 = vmatpush1.xpose.msra.mxu0 %v1762
    %1764 = vmatprep.subr.mxu0 0.0
    %v1765 = vand.u32 %v1026, 4294901760
    %v1766 = vsub.f32 %v1026, %v1765
    %v1767 = vand.u32 %v1766, 4294901760
    %1768 = vmatpush1.xpose.msra.mxu0 %v1767
    %1769 = vmatprep.subr.mxu0 0.0
    %v1770 = vand.u32 %v1029, 4294901760
    %v1771 = vsub.f32 %v1029, %v1770
    %v1772 = vand.u32 %v1771, 4294901760
    %1773 = vmatpush1.xpose.msra.mxu0 %v1772
    %1774 = vmatprep.mubr.f32.mxu0 0.0
    %v1775 = vand.u32 %v933, 4294901760
    %1776 = vmatmul.mubr.f32.gmra.mrb[0].mxu0 %v1775
    %v1777 = vpop.f32.mrb[0].mxu0
    %v1778 = vadd.f32 %v1610, %v1777
    %v1779 = vpop.f32.mrb[0].mxu0
    %v1780 = vadd.f32 %v1612, %v1779
    %1781 = vdwg.mxu0
    %1782 = vmatprep.subr.mxu0 0.0
    %v1783 = vand.u32 %v936, 4294901760
    %1784 = vmatpush1.xpose.msra.mxu0 %v1783
    %1785 = vmatprep.subr.mxu0 0.0
    %v1786 = vand.u32 %v939, 4294901760
    %1787 = vmatpush1.xpose.msra.mxu0 %v1786
    %1788 = vmatprep.subr.mxu0 0.0
    %v1789 = vand.u32 %v942, 4294901760
    %1790 = vmatpush1.xpose.msra.mxu0 %v1789
    %1791 = vmatprep.subr.mxu0 0.0
    %v1792 = vand.u32 %v945, 4294901760
    %1793 = vmatpush1.xpose.msra.mxu0 %v1792
    %1794 = vmatprep.subr.mxu0 0.0
    %v1795 = vand.u32 %v948, 4294901760
    %1796 = vmatpush1.xpose.msra.mxu0 %v1795
    %1797 = vmatprep.subr.mxu0 0.0
    %v1798 = vand.u32 %v951, 4294901760
    %1799 = vmatpush1.xpose.msra.mxu0 %v1798
    %1800 = vmatprep.subr.mxu0 0.0
    %v1801 = vand.u32 %v954, 4294901760
    %1802 = vmatpush1.xpose.msra.mxu0 %v1801
    %1803 = vmatprep.subr.mxu0 0.0
    %v1804 = vand.u32 %v957, 4294901760
    %1805 = vmatpush1.xpose.msra.mxu0 %v1804
    %1806 = vmatprep.subr.mxu0 0.0
    %v1807 = vand.u32 %v960, 4294901760
    %1808 = vmatpush1.xpose.msra.mxu0 %v1807
    %1809 = vmatprep.subr.mxu0 0.0
    %v1810 = vand.u32 %v963, 4294901760
    %1811 = vmatpush1.xpose.msra.mxu0 %v1810
    %1812 = vmatprep.subr.mxu0 0.0
    %v1813 = vand.u32 %v966, 4294901760
    %1814 = vmatpush1.xpose.msra.mxu0 %v1813
    %1815 = vmatprep.subr.mxu0 0.0
    %v1816 = vand.u32 %v969, 4294901760
    %1817 = vmatpush1.xpose.msra.mxu0 %v1816
    %1818 = vmatprep.subr.mxu0 0.0
    %v1819 = vand.u32 %v972, 4294901760
    %1820 = vmatpush1.xpose.msra.mxu0 %v1819
    %1821 = vmatprep.subr.mxu0 0.0
    %v1822 = vand.u32 %v975, 4294901760
    %1823 = vmatpush1.xpose.msra.mxu0 %v1822
    %1824 = vmatprep.subr.mxu0 0.0
    %v1825 = vand.u32 %v978, 4294901760
    %1826 = vmatpush1.xpose.msra.mxu0 %v1825
    %1827 = vmatprep.subr.mxu0 0.0
    %v1828 = vand.u32 %v981, 4294901760
    %1829 = vmatpush1.xpose.msra.mxu0 %v1828
    %1830 = vmatprep.subr.mxu0 0.0
    %v1831 = vand.u32 %v984, 4294901760
    %1832 = vmatpush1.xpose.msra.mxu0 %v1831
    %1833 = vmatprep.subr.mxu0 0.0
    %v1834 = vand.u32 %v987, 4294901760
    %1835 = vmatpush1.xpose.msra.mxu0 %v1834
    %1836 = vmatprep.subr.mxu0 0.0
    %v1837 = vand.u32 %v990, 4294901760
    %1838 = vmatpush1.xpose.msra.mxu0 %v1837
    %1839 = vmatprep.subr.mxu0 0.0
    %v1840 = vand.u32 %v993, 4294901760
    %1841 = vmatpush1.xpose.msra.mxu0 %v1840
    %1842 = vmatprep.subr.mxu0 0.0
    %v1843 = vand.u32 %v996, 4294901760
    %1844 = vmatpush1.xpose.msra.mxu0 %v1843
    %1845 = vmatprep.subr.mxu0 0.0
    %v1846 = vand.u32 %v999, 4294901760
    %1847 = vmatpush1.xpose.msra.mxu0 %v1846
    %1848 = vmatprep.subr.mxu0 0.0
    %v1849 = vand.u32 %v1002, 4294901760
    %1850 = vmatpush1.xpose.msra.mxu0 %v1849
    %1851 = vmatprep.subr.mxu0 0.0
    %v1852 = vand.u32 %v1005, 4294901760
    %1853 = vmatpush1.xpose.msra.mxu0 %v1852
    %1854 = vmatprep.subr.mxu0 0.0
    %v1855 = vand.u32 %v1008, 4294901760
    %1856 = vmatpush1.xpose.msra.mxu0 %v1855
    %1857 = vmatprep.subr.mxu0 0.0
    %v1858 = vand.u32 %v1011, 4294901760
    %1859 = vmatpush1.xpose.msra.mxu0 %v1858
    %1860 = vmatprep.subr.mxu0 0.0
    %v1861 = vand.u32 %v1014, 4294901760
    %1862 = vmatpush1.xpose.msra.mxu0 %v1861
    %1863 = vmatprep.subr.mxu0 0.0
    %v1864 = vand.u32 %v1017, 4294901760
    %1865 = vmatpush1.xpose.msra.mxu0 %v1864
    %1866 = vmatprep.subr.mxu0 0.0
    %v1867 = vand.u32 %v1020, 4294901760
    %1868 = vmatpush1.xpose.msra.mxu0 %v1867
    %1869 = vmatprep.subr.mxu0 0.0
    %v1870 = vand.u32 %v1023, 4294901760
    %1871 = vmatpush1.xpose.msra.mxu0 %v1870
    %1872 = vmatprep.subr.mxu0 0.0
    %v1873 = vand.u32 %v1026, 4294901760
    %1874 = vmatpush1.xpose.msra.mxu0 %v1873
    %1875 = vmatprep.subr.mxu0 0.0
    %v1876 = vand.u32 %v1029, 4294901760
    %1877 = vmatpush1.xpose.msra.mxu0 %v1876
    %1878 = vmatprep.mubr.f32.mxu0 0.0
    %v1879 = vand.u32 %v933, 4294901760
    %1880 = vmatmul.mubr.f32.gmra.mrb[0].mxu0 %v1879
    %v1881 = vpop.f32.mrb[0].mxu0
    %v1882 = vadd.f32 %v1778, %v1881
    %v1883 = vpop.f32.mrb[0].mxu0
    %v1884 = vadd.f32 %v1780, %v1883
    %1885 = vdwg.mxu0
    %v1888 = vcombine.low %v1882, %v1884
    %v1890 = vunpack.c.l.s4 1983009808
    %v1891 = vunpack.c.0.s8 %v1890
    %v1892 = vlaneseq
    %v1893 = vshrl.u32 %v1892, 7
    %v1894 = vsub.s32 %v1891, %v1893
    %v1895 = vrot.slane %v1888, %v1894
    %v1897 = vmul.f32 %v12, %v1895
    %1898 = vst [vmem:[#allocation2] sm:$0xf] %v1897
    // Predicated region
    $region10: #{tpu_custom_call.1} parent=1 // pred_check
      _
    $region11: #{tpu_custom_call.1} parent=1 // pred_check_branch
      %1900 = sbr.rel (0) target = $region13
    $region12: #{tpu_custom_call.1} parent=1 // pred_region
      %s1902 = ssub.s32 64, 64
      %1903 = vsyncadd [#allocation3], %s1902
      %s1905 = sshll.u32 [#allocation2], 4
      %s1906 = int_to_ptr.vmem [resolvable:$true] %s1905
      %1908 = dma.vmem_to_hbm [thread:$0]  %s1906, 64, %s2, [#allocation3]
    $region13: #{tpu_custom_call.1} parent=1 // pred_fallthru
      _
    // Predicated region
    $region14: #{tpu_custom_call.1} parent=1 // pred_check
      _
    $region15: #{tpu_custom_call.1} parent=1 // pred_check_branch
      %1910 = sbr.rel (0) target = $region17
    $region16: #{tpu_custom_call.1} parent=1 // pred_region
      %1911 = dma.done [#allocation3], 64
    $region17: #{tpu_custom_call.1} parent=1 // pred_fallthru
      _
    %1912 = vsyncpa [#allocation3], 1

</llo_original>
